<compile_context>
chip_gen: v5e
topology: v5e:2x2
jax: 0.10.0
libtpu: 0.0.40
codegen_flags: <defaults>
</compile_context>

<pallas_src>
import functools

import jax
import jax.numpy as jnp
import numpy as np
from jax import lax
from jax.experimental import pallas as pl
from jax.experimental.pallas import tpu as pltpu


# ----------------------------- kernel helpers -------------------------------

def _layernorm(x, g, b, eps=1e-5):
    mu = jnp.mean(x, axis=-1, keepdims=True)
    xc = x - mu
    var = jnp.mean(xc * xc, axis=-1, keepdims=True)
    return xc * lax.rsqrt(var + eps) * g + b


def _attend(qh, kT, vT, woh, bo, mask_bias, scale):
    """Head-batched attention for ONE batch element.

    qh : (H, Lq, dh) bf16  row-major per-head queries
    kT : (H, dh, Lk) bf16  per-head transposed keys
    vT : (H, dh, Lk) bf16  per-head transposed values
    woh: (H, dh, C)  bf16  head-major output projection (head merge folded in)
    bo : (1, C)      f32
    mask_bias: (1, 1, Lk) additive f32 key-padding bias, or None
    returns (Lq, C) f32
    """
    s = jnp.einsum('hqd,hdk->hqk', qh, kT,
                   preferred_element_type=jnp.float32) * scale       # (H, Lq, Lk)
    if mask_bias is not None:
        s = s + mask_bias
    m = jnp.max(s, axis=-1, keepdims=True)
    p = jnp.exp(s - m)
    p = p * pl.reciprocal(jnp.sum(p, axis=-1, keepdims=True), approx=True)
    ctx = jnp.einsum('hqk,hdk->hqd', p.astype(jnp.bfloat16), vT,
                     preferred_element_type=jnp.float32)              # (H, Lq, dh)
    out = jnp.einsum('hqd,hdc->hqc', ctx.astype(jnp.bfloat16), woh,
                     preferred_element_type=jnp.float32)              # (H, Lq, C)
    return jnp.sum(out, axis=0) + bo                                  # (Lq, C)


# --------------------------------- kernel -----------------------------------

def encoder_layer_kernel(
        q_ref, k_ref, maskb_ref,
        sa_wqkv, sa_bqkv, sa_woh, sa_bo,
        ca_wq, ca_bq, ca_wkv, ca_bkv, ca_woh, ca_bo,
        w1_ref, b1_ref, w2_ref, b2_ref,
        g1_ref, be1_ref, g2_ref, be2_ref, g3_ref, be3_ref,
        out_ref, *, nhead):
    bf16 = jnp.bfloat16
    Pq, C = q_ref.shape
    Pk = k_ref.shape[0]
    H = nhead
    dh = C // H
    scale = 1.0 / float(dh) ** 0.5

    x0 = q_ref[...].astype(jnp.float32)          # (Pq, C)
    kv_in = k_ref[...].astype(jnp.float32)       # (Pk, C)
    maskb = maskb_ref[...]                       # (1, 1, Pq) additive key bias

    # --- self attention: ONE fused lane-dense QKV matmul (N = 3C) ---
    qkv = jnp.dot(x0.astype(bf16), sa_wqkv[...],
                  preferred_element_type=jnp.float32) + sa_bqkv[...]  # (Pq, 3C)
    # single 2-D transpose + layout-preserving leading split -> head-major views
    qkvT = qkv.T.reshape(3 * H, dh, Pq)                               # (3H, dh, Pq)
    qh = jnp.swapaxes(qkvT[:H], -1, -2).astype(bf16)                  # (H, Pq, dh)
    kT = qkvT[H:2 * H].astype(bf16)                                   # (H, dh, Pq)
    vT = qkvT[2 * H:].astype(bf16)                                    # (H, dh, Pq)
    sa = _attend(qh, kT, vT, sa_woh[...], sa_bo[...], maskb, scale)
    x = _layernorm(x0 + sa, g1_ref[...], be1_ref[...])

    # --- cross attention: Q from x, fused KV from key rows ---
    q2 = jnp.dot(x.astype(bf16), ca_wq[...],
                 preferred_element_type=jnp.float32) + ca_bq[...]     # (Pq, C)
    qh2 = jnp.swapaxes(q2.T.reshape(H, dh, Pq), -1, -2).astype(bf16)  # (H, Pq, dh)
    kvp = jnp.dot(kv_in.astype(bf16), ca_wkv[...],
                  preferred_element_type=jnp.float32) + ca_bkv[...]   # (Pk, 2C)
    kvT = kvp.T.reshape(2 * H, dh, Pk)                                # (2H, dh, Pk)
    ca = _attend(qh2, kvT[:H].astype(bf16), kvT[H:].astype(bf16),
                 ca_woh[...], ca_bo[...], None, scale)
    x = _layernorm(x + ca, g2_ref[...], be2_ref[...])

    # --- feed-forward (relu) + residual + norm3 ---
    h = jnp.dot(x.astype(bf16), w1_ref[...],
                preferred_element_type=jnp.float32) + b1_ref[...]
    h = jnp.maximum(h, 0.0)
    ff = jnp.dot(h.astype(bf16), w2_ref[...],
                 preferred_element_type=jnp.float32) + b2_ref[...]
    x = _layernorm(x + ff, g3_ref[...], be3_ref[...])

    out_ref[...] = x.astype(out_ref.dtype)


# ------------------------------ wrapper / params -----------------------------

def init_params(rng, C, F):
    names_shapes = [
        ('sa_wq', (C, C)), ('sa_bq', (1, C)), ('sa_wk', (C, C)), ('sa_bk', (1, C)),
        ('sa_wv', (C, C)), ('sa_bv', (1, C)), ('sa_wo', (C, C)), ('sa_bo', (1, C)),
        ('ca_wq', (C, C)), ('ca_bq', (1, C)), ('ca_wk', (C, C)), ('ca_bk', (1, C)),
        ('ca_wv', (C, C)), ('ca_bv', (1, C)), ('ca_wo', (C, C)), ('ca_bo', (1, C)),
        ('w1', (C, F)), ('b1', (1, F)), ('w2', (F, C)), ('b2', (1, C)),
        ('g1', (1, C)), ('be1', (1, C)), ('g2', (1, C)), ('be2', (1, C)),
        ('g3', (1, C)), ('be3', (1, C)),
    ]
    keys = jax.random.split(rng, len(names_shapes))
    params = {}
    for (name, shape), k in zip(names_shapes, keys):
        if name in ('g1', 'g2', 'g3'):   # LayerNorm weights ~ 1
            params[name] = jnp.ones(shape, jnp.float32) + \
                0.01 * jax.random.normal(k, shape, jnp.float32)
        else:
            params[name] = 0.05 * jax.random.normal(k, shape, jnp.float32)
    return params


def transformer_encoder_layer(query, key, padding_mask, params, nhead):
    B, Pq, C = query.shape
    _, Pk, _ = key.shape
    H = nhead
    dh = C // H
    # Clean sublane-aligned layouts assumed by the kernel.
    assert Pq % 8 == 0 and Pk % 8 == 0 and dh % 8 == 0 and C % H == 0
    bf16 = jnp.bfloat16

    # Fold batch into rows; grid handles per-batch attention.
    q2d = query.reshape(B * Pq, C)
    k2d = key.reshape(B * Pk, C)
    # key_padding_mask (True = ignore) -> additive bias, pre-shaped so the kernel
    # consumes exactly one (1, 1, Pq) block per grid step (self-attn only).
    mask_bias = jnp.where(padding_mask, -1e9, 0.0).astype(jnp.float32)[:, None, :]

    p = params
    packed = [
        # self-attn: fused QKV, head-major output projection
        jnp.concatenate([p['sa_wq'], p['sa_wk'], p['sa_wv']], axis=1).astype(bf16),
        jnp.concatenate([p['sa_bq'], p['sa_bk'], p['sa_bv']], axis=1),
        p['sa_wo'].reshape(H, dh, C).astype(bf16), p['sa_bo'],
        # cross-attn: Q weight, fused KV, head-major output projection
        p['ca_wq'].astype(bf16), p['ca_bq'],
        jnp.concatenate([p['ca_wk'], p['ca_wv']], axis=1).astype(bf16),
        jnp.concatenate([p['ca_bk'], p['ca_bv']], axis=1),
        p['ca_wo'].reshape(H, dh, C).astype(bf16), p['ca_bo'],
        # FFN + LayerNorms
        p['w1'].astype(bf16), p['b1'], p['w2'].astype(bf16), p['b2'],
        p['g1'], p['be1'], p['g2'], p['be2'], p['g3'], p['be3'],
    ]

    def const_spec(arr):
        rank = arr.ndim
        return pl.BlockSpec(arr.shape, lambda b, _r=rank: (0,) * _r)

    in_specs = [
        pl.BlockSpec((Pq, C), lambda b: (b, 0)),        # query rows of batch b
        pl.BlockSpec((Pk, C), lambda b: (b, 0)),        # key rows of batch b
        pl.BlockSpec((1, 1, Pq), lambda b: (b, 0, 0)),  # mask bias of batch b
    ] + [const_spec(a) for a in packed]                 # grid-invariant weights

    out2d = pl.pallas_call(
        functools.partial(encoder_layer_kernel, nhead=nhead),
        grid=(B,),
        out_shape=jax.ShapeDtypeStruct((B * Pq, C), query.dtype),
        in_specs=in_specs,
        out_specs=pl.BlockSpec((Pq, C), lambda b: (b, 0)),
        compiler_params=pltpu.CompilerParams(
            dimension_semantics=("parallel",),
            vmem_limit_bytes=32 * 1024 * 1024),
    )(q2d, k2d, mask_bias, *packed)
    return out2d.reshape(B, Pq, C)


# ----------------------------- pure-JAX reference ----------------------------

def reference(query, key, padding_mask, params, nhead):
    p = params

    def mha(q, k, v, wq, bq, wk, bk, wv, bv, wo, bo, mask):
        B, Lq, C = q.shape
        Lk = k.shape[1]
        dh = C // nhead
        qp = (q @ wq + bq).reshape(B, Lq, nhead, dh).transpose(0, 2, 1, 3)
        kp = (k @ wk + bk).reshape(B, Lk, nhead, dh).transpose(0, 2, 1, 3)
        vp = (v @ wv + bv).reshape(B, Lk, nhead, dh).transpose(0, 2, 1, 3)
        s = jnp.einsum('bhqd,bhkd->bhqk', qp, kp) / (dh ** 0.5)
        if mask is not None:
            s = s + jnp.where(mask, -1e9, 0.0)[:, None, None, :]
        a = jax.nn.softmax(s, axis=-1)
        ctx = jnp.einsum('bhqk,bhkd->bhqd', a, vp).transpose(0, 2, 1, 3).reshape(B, Lq, C)
        return ctx @ wo + bo

    def ln(x, g, b):
        mu = x.mean(-1, keepdims=True)
        var = ((x - mu) ** 2).mean(-1, keepdims=True)
        return (x - mu) / jnp.sqrt(var + 1e-5) * g + b

    x = query
    sa = mha(x, x, x, p['sa_wq'], p['sa_bq'], p['sa_wk'], p['sa_bk'],
             p['sa_wv'], p['sa_bv'], p['sa_wo'], p['sa_bo'], padding_mask)
    x = ln(x + sa, p['g1'], p['be1'])
    ca = mha(x, key, key, p['ca_wq'], p['ca_bq'], p['ca_wk'], p['ca_bk'],
             p['ca_wv'], p['ca_bv'], p['ca_wo'], p['ca_bo'], None)
    x = ln(x + ca, p['g2'], p['be2'])
    ff = jnp.maximum(x @ p['w1'] + p['b1'], 0.0) @ p['w2'] + p['b2']
    x = ln(x + ff, p['g3'], p['be3'])
    return x


# ----------------------------------- main ------------------------------------

if __name__ == "__main__":
    B, Pq, Pk, d_model, nhead, dim_ff = 2, 8, 16, 32, 4, 64

    root = jax.random.PRNGKey(0)
    kq, kk, kp = jax.random.split(root, 3)
    query = jax.random.normal(kq, (B, Pq, d_model), jnp.float32)
    key = jax.random.normal(kk, (B, Pk, d_model), jnp.float32)
    # key_padding_mask for self-attention: True = ignore (mask last 2 slots of batch 1)
    padding_mask = jnp.zeros((B, Pq), dtype=bool).at[1, -2:].set(True)

    params = init_params(kp, d_model, dim_ff)

    out = transformer_encoder_layer(query, key, padding_mask, params, nhead)
    out = jax.block_until_ready(out)

    ref = reference(query, key, padding_mask, params, nhead)
    assert out.shape == (B, Pq, d_model)
    err = float(np.max(np.abs(np.asarray(out) - np.asarray(ref))))
    # bf16 MXU operands + approx reciprocal => small, bounded deviation vs f32 ref.
    assert np.allclose(np.asarray(out), np.asarray(ref), rtol=5e-2, atol=5e-2), \
        f"Pallas kernel mismatch vs JAX reference (max abs err {err:.3e})"

    print("KERNEL_OK")
</pallas_src>

<mosaic_0001>
module attributes {stable_mosaic.version = 11 : i64} {
  func.func @encoder_layer_kernel(%arg0: i32, %arg1: memref<8x32xf32, #tpu.memory_space<vmem>>, %arg2: memref<16x32xf32, #tpu.memory_space<vmem>>, %arg3: memref<1x1x8xf32, #tpu.memory_space<vmem>>, %arg4: memref<32x96xbf16, #tpu.memory_space<vmem>>, %arg5: memref<1x96xf32, #tpu.memory_space<vmem>>, %arg6: memref<4x8x32xbf16, #tpu.memory_space<vmem>>, %arg7: memref<1x32xf32, #tpu.memory_space<vmem>>, %arg8: memref<32x32xbf16, #tpu.memory_space<vmem>>, %arg9: memref<1x32xf32, #tpu.memory_space<vmem>>, %arg10: memref<32x64xbf16, #tpu.memory_space<vmem>>, %arg11: memref<1x64xf32, #tpu.memory_space<vmem>>, %arg12: memref<4x8x32xbf16, #tpu.memory_space<vmem>>, %arg13: memref<1x32xf32, #tpu.memory_space<vmem>>, %arg14: memref<32x64xbf16, #tpu.memory_space<vmem>>, %arg15: memref<1x64xf32, #tpu.memory_space<vmem>>, %arg16: memref<64x32xbf16, #tpu.memory_space<vmem>>, %arg17: memref<1x32xf32, #tpu.memory_space<vmem>>, %arg18: memref<1x32xf32, #tpu.memory_space<vmem>>, %arg19: memref<1x32xf32, #tpu.memory_space<vmem>>, %arg20: memref<1x32xf32, #tpu.memory_space<vmem>>, %arg21: memref<1x32xf32, #tpu.memory_space<vmem>>, %arg22: memref<1x32xf32, #tpu.memory_space<vmem>>, %arg23: memref<1x32xf32, #tpu.memory_space<vmem>>, %arg24: memref<8x32xf32, #tpu.memory_space<vmem>>) attributes {dimension_semantics = [#tpu.dimension_semantics<parallel>], iteration_bounds = array<i64: 2>, scalar_prefetch = 0 : i64, scratch_operands = 0 : i64, tpu.core_type = #tpu.core_type<tc>, window_params = [{transform_indices = @transform_0, window_bounds = array<i64: 8, 32>}, {transform_indices = @transform_1, window_bounds = array<i64: 16, 32>}, {transform_indices = @transform_2, window_bounds = array<i64: 1, 1, 8>}, {pipeline_mode = #tpu.pipeline_mode<synchronous>, transform_indices = @transform_3, window_bounds = array<i64: 32, 96>}, {pipeline_mode = #tpu.pipeline_mode<synchronous>, transform_indices = @transform_4, window_bounds = array<i64: 1, 96>}, {pipeline_mode = #tpu.pipeline_mode<synchronous>, transform_indices = @transform_5, window_bounds = array<i64: 4, 8, 32>}, {pipeline_mode = #tpu.pipeline_mode<synchronous>, transform_indices = @transform_6, window_bounds = array<i64: 1, 32>}, {pipeline_mode = #tpu.pipeline_mode<synchronous>, transform_indices = @transform_7, window_bounds = array<i64: 32, 32>}, {pipeline_mode = #tpu.pipeline_mode<synchronous>, transform_indices = @transform_8, window_bounds = array<i64: 1, 32>}, {pipeline_mode = #tpu.pipeline_mode<synchronous>, transform_indices = @transform_9, window_bounds = array<i64: 32, 64>}, {pipeline_mode = #tpu.pipeline_mode<synchronous>, transform_indices = @transform_10, window_bounds = array<i64: 1, 64>}, {pipeline_mode = #tpu.pipeline_mode<synchronous>, transform_indices = @transform_11, window_bounds = array<i64: 4, 8, 32>}, {pipeline_mode = #tpu.pipeline_mode<synchronous>, transform_indices = @transform_12, window_bounds = array<i64: 1, 32>}, {pipeline_mode = #tpu.pipeline_mode<synchronous>, transform_indices = @transform_13, window_bounds = array<i64: 32, 64>}, {pipeline_mode = #tpu.pipeline_mode<synchronous>, transform_indices = @transform_14, window_bounds = array<i64: 1, 64>}, {pipeline_mode = #tpu.pipeline_mode<synchronous>, transform_indices = @transform_15, window_bounds = array<i64: 64, 32>}, {pipeline_mode = #tpu.pipeline_mode<synchronous>, transform_indices = @transform_16, window_bounds = array<i64: 1, 32>}, {pipeline_mode = #tpu.pipeline_mode<synchronous>, transform_indices = @transform_17, window_bounds = array<i64: 1, 32>}, {pipeline_mode = #tpu.pipeline_mode<synchronous>, transform_indices = @transform_18, window_bounds = array<i64: 1, 32>}, {pipeline_mode = #tpu.pipeline_mode<synchronous>, transform_indices = @transform_19, window_bounds = array<i64: 1, 32>}, {pipeline_mode = #tpu.pipeline_mode<synchronous>, transform_indices = @transform_20, window_bounds = array<i64: 1, 32>}, {pipeline_mode = #tpu.pipeline_mode<synchronous>, transform_indices = @transform_21, window_bounds = array<i64: 1, 32>}, {pipeline_mode = #tpu.pipeline_mode<synchronous>, transform_indices = @transform_22, window_bounds = array<i64: 1, 32>}, {transform_indices = @transform_23, window_bounds = array<i64: 8, 32>}]} {
    %c0 = arith.constant 0 : index
    %c0_0 = arith.constant 0 : index
    %0 = vector.load %arg1[%c0, %c0_0] : memref<8x32xf32, #tpu.memory_space<vmem>>, vector<8x32xf32>
    %c0_1 = arith.constant 0 : index
    %c0_2 = arith.constant 0 : index
    %1 = vector.load %arg2[%c0_1, %c0_2] : memref<16x32xf32, #tpu.memory_space<vmem>>, vector<16x32xf32>
    %c0_3 = arith.constant 0 : index
    %c0_4 = arith.constant 0 : index
    %c0_5 = arith.constant 0 : index
    %2 = vector.load %arg3[%c0_3, %c0_4, %c0_5] : memref<1x1x8xf32, #tpu.memory_space<vmem>>, vector<1x1x8xf32>
    %3 = arith.truncf %0 : vector<8x32xf32> to vector<8x32xbf16>
    %c0_6 = arith.constant 0 : index
    %c0_7 = arith.constant 0 : index
    %4 = vector.load %arg4[%c0_6, %c0_7] : memref<32x96xbf16, #tpu.memory_space<vmem>>, vector<32x96xbf16>
    %cst = arith.constant dense<0.000000e+00> : vector<8x96xf32>
    %5 = tpu.matmul %3, %4, %cst {dimension_numbers = #tpu.dot_dimension_numbers<[1], [0], [0], [1], [0, 0, 1, 1], [], []>} : vector<8x32xbf16>, vector<32x96xbf16>, vector<8x96xf32> -> vector<8x96xf32>
    %c0_8 = arith.constant 0 : index
    %c0_9 = arith.constant 0 : index
    %6 = vector.load %arg5[%c0_8, %c0_9] : memref<1x96xf32, #tpu.memory_space<vmem>>, vector<1x96xf32>
    %7 = vector.broadcast %6 : vector<1x96xf32> to vector<8x96xf32>
    %8 = arith.addf %5, %7 : vector<8x96xf32>
    %9 = tpu.transpose %8, [1, 0] : vector<8x96xf32> -> vector<96x8xf32>
    %10 = vector.shape_cast %9 : vector<96x8xf32> to vector<12x8x8xf32>
    %11 = vector.extract_strided_slice %10 {offsets = [0, 0, 0], sizes = [4, 8, 8], strides = [1, 1, 1]} : vector<12x8x8xf32> to vector<4x8x8xf32>
    %12 = tpu.transpose %11, [0, 2, 1] : vector<4x8x8xf32> -> vector<4x8x8xf32>
    %13 = arith.truncf %12 : vector<4x8x8xf32> to vector<4x8x8xbf16>
    %14 = vector.extract_strided_slice %10 {offsets = [4, 0, 0], sizes = [4, 8, 8], strides = [1, 1, 1]} : vector<12x8x8xf32> to vector<4x8x8xf32>
    %15 = arith.truncf %14 : vector<4x8x8xf32> to vector<4x8x8xbf16>
    %16 = vector.extract_strided_slice %10 {offsets = [8, 0, 0], sizes = [4, 8, 8], strides = [1, 1, 1]} : vector<12x8x8xf32> to vector<4x8x8xf32>
    %17 = arith.truncf %16 : vector<4x8x8xf32> to vector<4x8x8xbf16>
    %c0_10 = arith.constant 0 : index
    %c0_11 = arith.constant 0 : index
    %c0_12 = arith.constant 0 : index
    %18 = vector.load %arg6[%c0_10, %c0_11, %c0_12] : memref<4x8x32xbf16, #tpu.memory_space<vmem>>, vector<4x8x32xbf16>
    %c0_13 = arith.constant 0 : index
    %c0_14 = arith.constant 0 : index
    %19 = vector.load %arg7[%c0_13, %c0_14] : memref<1x32xf32, #tpu.memory_space<vmem>>, vector<1x32xf32>
    "tpu.trace_start"() <{level = 10 : i32, message = "hqd,hdk->hqk"}> : () -> ()
    %cst_15 = arith.constant dense<0.000000e+00> : vector<4x8x8xf32>
    %20 = tpu.matmul %13, %15, %cst_15 {dimension_numbers = #tpu.dot_dimension_numbers<[2], [1], [1], [2], [0, 0, 0, 1, 1, 2], [0], [0]>} : vector<4x8x8xbf16>, vector<4x8x8xbf16>, vector<4x8x8xf32> -> vector<4x8x8xf32>
    "tpu.trace_stop"() : () -> ()
    %cst_16 = arith.constant 0.353553385 : f32
    %21 = vector.broadcast %cst_16 : f32 to vector<4x8x8xf32>
    %22 = arith.mulf %20, %21 : vector<4x8x8xf32>
    %23 = vector.broadcast %2 : vector<1x1x8xf32> to vector<4x8x8xf32>
    %24 = arith.addf %22, %23 : vector<4x8x8xf32>
    %cst_17 = arith.constant dense<0xFF800000> : vector<4x8xf32>
    %25 = vector.multi_reduction <maximumf>, %24, %cst_17 [2] : vector<4x8x8xf32> to vector<4x8xf32>
    %26 = vector.shape_cast %25 : vector<4x8xf32> to vector<4x8x1xf32>
    %27 = vector.broadcast %26 : vector<4x8x1xf32> to vector<4x8x8xf32>
    %28 = arith.subf %24, %27 : vector<4x8x8xf32>
    %29 = math.exp %28 : vector<4x8x8xf32>
    %cst_18 = arith.constant dense<0.000000e+00> : vector<4x8xf32>
    %30 = vector.multi_reduction <add>, %29, %cst_18 [2] : vector<4x8x8xf32> to vector<4x8xf32>
    %31 = vector.shape_cast %30 : vector<4x8xf32> to vector<4x8x1xf32>
    %32 = tpu.reciprocal %31 {approx = true} : vector<4x8x1xf32> -> vector<4x8x1xf32>
    %33 = vector.broadcast %32 : vector<4x8x1xf32> to vector<4x8x8xf32>
    %34 = arith.mulf %29, %33 : vector<4x8x8xf32>
    %35 = arith.truncf %34 : vector<4x8x8xf32> to vector<4x8x8xbf16>
    "tpu.trace_start"() <{level = 10 : i32, message = "hqk,hdk->hqd"}> : () -> ()
    %cst_19 = arith.constant dense<0.000000e+00> : vector<4x8x8xf32>
    %36 = tpu.matmul %35, %17, %cst_19 {dimension_numbers = #tpu.dot_dimension_numbers<[2], [2], [1], [1], [0, 0, 0, 1, 1, 1], [0], [0]>} : vector<4x8x8xbf16>, vector<4x8x8xbf16>, vector<4x8x8xf32> -> vector<4x8x8xf32>
    "tpu.trace_stop"() : () -> ()
    %37 = arith.truncf %36 : vector<4x8x8xf32> to vector<4x8x8xbf16>
    "tpu.trace_start"() <{level = 10 : i32, message = "hqd,hdc->hqc"}> : () -> ()
    %cst_20 = arith.constant dense<0.000000e+00> : vector<4x8x32xf32>
    %38 = tpu.matmul %37, %18, %cst_20 {dimension_numbers = #tpu.dot_dimension_numbers<[2], [1], [1], [2], [0, 0, 0, 1, 1, 2], [0], [0]>} : vector<4x8x8xbf16>, vector<4x8x32xbf16>, vector<4x8x32xf32> -> vector<4x8x32xf32>
    "tpu.trace_stop"() : () -> ()
    %cst_21 = arith.constant dense<0.000000e+00> : vector<8x32xf32>
    %39 = vector.multi_reduction <add>, %38, %cst_21 [0] : vector<4x8x32xf32> to vector<8x32xf32>
    %40 = vector.broadcast %19 : vector<1x32xf32> to vector<8x32xf32>
    %41 = arith.addf %39, %40 : vector<8x32xf32>
    %42 = arith.addf %0, %41 : vector<8x32xf32>
    %c0_22 = arith.constant 0 : index
    %c0_23 = arith.constant 0 : index
    %43 = vector.load %arg18[%c0_22, %c0_23] : memref<1x32xf32, #tpu.memory_space<vmem>>, vector<1x32xf32>
    %c0_24 = arith.constant 0 : index
    %c0_25 = arith.constant 0 : index
    %44 = vector.load %arg19[%c0_24, %c0_25] : memref<1x32xf32, #tpu.memory_space<vmem>>, vector<1x32xf32>
    %cst_26 = arith.constant dense<0.000000e+00> : vector<8xf32>
    %45 = vector.multi_reduction <add>, %42, %cst_26 [1] : vector<8x32xf32> to vector<8xf32>
    %46 = vector.shape_cast %45 : vector<8xf32> to vector<8x1xf32>
    %cst_27 = arith.constant 3.200000e+01 : f32
    %47 = vector.broadcast %cst_27 : f32 to vector<8x1xf32>
    %48 = arith.divf %46, %47 : vector<8x1xf32>
    %49 = vector.broadcast %48 : vector<8x1xf32> to vector<8x32xf32>
    %50 = arith.subf %42, %49 : vector<8x32xf32>
    %51 = arith.mulf %50, %50 : vector<8x32xf32>
    %cst_28 = arith.constant dense<0.000000e+00> : vector<8xf32>
    %52 = vector.multi_reduction <add>, %51, %cst_28 [1] : vector<8x32xf32> to vector<8xf32>
    %53 = vector.shape_cast %52 : vector<8xf32> to vector<8x1xf32>
    %cst_29 = arith.constant 3.200000e+01 : f32
    %54 = vector.broadcast %cst_29 : f32 to vector<8x1xf32>
    %55 = arith.divf %53, %54 : vector<8x1xf32>
    %cst_30 = arith.constant 9.99999974E-6 : f32
    %56 = vector.broadcast %cst_30 : f32 to vector<8x1xf32>
    %57 = arith.addf %55, %56 : vector<8x1xf32>
    %58 = math.rsqrt %57 : vector<8x1xf32>
    %59 = vector.broadcast %58 : vector<8x1xf32> to vector<8x32xf32>
    %60 = arith.mulf %50, %59 : vector<8x32xf32>
    %61 = vector.broadcast %43 : vector<1x32xf32> to vector<8x32xf32>
    %62 = arith.mulf %60, %61 : vector<8x32xf32>
    %63 = vector.broadcast %44 : vector<1x32xf32> to vector<8x32xf32>
    %64 = arith.addf %62, %63 : vector<8x32xf32>
    %65 = arith.truncf %64 : vector<8x32xf32> to vector<8x32xbf16>
    %c0_31 = arith.constant 0 : index
    %c0_32 = arith.constant 0 : index
    %66 = vector.load %arg8[%c0_31, %c0_32] : memref<32x32xbf16, #tpu.memory_space<vmem>>, vector<32x32xbf16>
    %cst_33 = arith.constant dense<0.000000e+00> : vector<8x32xf32>
    %67 = tpu.matmul %65, %66, %cst_33 {dimension_numbers = #tpu.dot_dimension_numbers<[1], [0], [0], [1], [0, 0, 1, 1], [], []>} : vector<8x32xbf16>, vector<32x32xbf16>, vector<8x32xf32> -> vector<8x32xf32>
    %c0_34 = arith.constant 0 : index
    %c0_35 = arith.constant 0 : index
    %68 = vector.load %arg9[%c0_34, %c0_35] : memref<1x32xf32, #tpu.memory_space<vmem>>, vector<1x32xf32>
    %69 = vector.broadcast %68 : vector<1x32xf32> to vector<8x32xf32>
    %70 = arith.addf %67, %69 : vector<8x32xf32>
    %71 = tpu.transpose %70, [1, 0] : vector<8x32xf32> -> vector<32x8xf32>
    %72 = vector.shape_cast %71 : vector<32x8xf32> to vector<4x8x8xf32>
    %73 = tpu.transpose %72, [0, 2, 1] : vector<4x8x8xf32> -> vector<4x8x8xf32>
    %74 = arith.truncf %73 : vector<4x8x8xf32> to vector<4x8x8xbf16>
    %75 = arith.truncf %1 : vector<16x32xf32> to vector<16x32xbf16>
    %c0_36 = arith.constant 0 : index
    %c0_37 = arith.constant 0 : index
    %76 = vector.load %arg10[%c0_36, %c0_37] : memref<32x64xbf16, #tpu.memory_space<vmem>>, vector<32x64xbf16>
    %cst_38 = arith.constant dense<0.000000e+00> : vector<16x64xf32>
    %77 = tpu.matmul %75, %76, %cst_38 {dimension_numbers = #tpu.dot_dimension_numbers<[1], [0], [0], [1], [0, 0, 1, 1], [], []>} : vector<16x32xbf16>, vector<32x64xbf16>, vector<16x64xf32> -> vector<16x64xf32>
    %c0_39 = arith.constant 0 : index
    %c0_40 = arith.constant 0 : index
    %78 = vector.load %arg11[%c0_39, %c0_40] : memref<1x64xf32, #tpu.memory_space<vmem>>, vector<1x64xf32>
    %79 = vector.broadcast %78 : vector<1x64xf32> to vector<16x64xf32>
    %80 = arith.addf %77, %79 : vector<16x64xf32>
    %81 = tpu.transpose %80, [1, 0] : vector<16x64xf32> -> vector<64x16xf32>
    %82 = vector.shape_cast %81 : vector<64x16xf32> to vector<8x8x16xf32>
    %83 = vector.extract_strided_slice %82 {offsets = [0, 0, 0], sizes = [4, 8, 16], strides = [1, 1, 1]} : vector<8x8x16xf32> to vector<4x8x16xf32>
    %84 = arith.truncf %83 : vector<4x8x16xf32> to vector<4x8x16xbf16>
    %85 = vector.extract_strided_slice %82 {offsets = [4, 0, 0], sizes = [4, 8, 16], strides = [1, 1, 1]} : vector<8x8x16xf32> to vector<4x8x16xf32>
    %86 = arith.truncf %85 : vector<4x8x16xf32> to vector<4x8x16xbf16>
    %c0_41 = arith.constant 0 : index
    %c0_42 = arith.constant 0 : index
    %c0_43 = arith.constant 0 : index
    %87 = vector.load %arg12[%c0_41, %c0_42, %c0_43] : memref<4x8x32xbf16, #tpu.memory_space<vmem>>, vector<4x8x32xbf16>
    %c0_44 = arith.constant 0 : index
    %c0_45 = arith.constant 0 : index
    %88 = vector.load %arg13[%c0_44, %c0_45] : memref<1x32xf32, #tpu.memory_space<vmem>>, vector<1x32xf32>
    "tpu.trace_start"() <{level = 10 : i32, message = "hqd,hdk->hqk"}> : () -> ()
    %cst_46 = arith.constant dense<0.000000e+00> : vector<4x8x16xf32>
    %89 = tpu.matmul %74, %84, %cst_46 {dimension_numbers = #tpu.dot_dimension_numbers<[2], [1], [1], [2], [0, 0, 0, 1, 1, 2], [0], [0]>} : vector<4x8x8xbf16>, vector<4x8x16xbf16>, vector<4x8x16xf32> -> vector<4x8x16xf32>
    "tpu.trace_stop"() : () -> ()
    %cst_47 = arith.constant 0.353553385 : f32
    %90 = vector.broadcast %cst_47 : f32 to vector<4x8x16xf32>
    %91 = arith.mulf %89, %90 : vector<4x8x16xf32>
    %cst_48 = arith.constant dense<0xFF800000> : vector<4x8xf32>
    %92 = vector.multi_reduction <maximumf>, %91, %cst_48 [2] : vector<4x8x16xf32> to vector<4x8xf32>
    %93 = vector.shape_cast %92 : vector<4x8xf32> to vector<4x8x1xf32>
    %94 = vector.broadcast %93 : vector<4x8x1xf32> to vector<4x8x16xf32>
    %95 = arith.subf %91, %94 : vector<4x8x16xf32>
    %96 = math.exp %95 : vector<4x8x16xf32>
    %cst_49 = arith.constant dense<0.000000e+00> : vector<4x8xf32>
    %97 = vector.multi_reduction <add>, %96, %cst_49 [2] : vector<4x8x16xf32> to vector<4x8xf32>
    %98 = vector.shape_cast %97 : vector<4x8xf32> to vector<4x8x1xf32>
    %99 = tpu.reciprocal %98 {approx = true} : vector<4x8x1xf32> -> vector<4x8x1xf32>
    %100 = vector.broadcast %99 : vector<4x8x1xf32> to vector<4x8x16xf32>
    %101 = arith.mulf %96, %100 : vector<4x8x16xf32>
    %102 = arith.truncf %101 : vector<4x8x16xf32> to vector<4x8x16xbf16>
    "tpu.trace_start"() <{level = 10 : i32, message = "hqk,hdk->hqd"}> : () -> ()
    %cst_50 = arith.constant dense<0.000000e+00> : vector<4x8x8xf32>
    %103 = tpu.matmul %102, %86, %cst_50 {dimension_numbers = #tpu.dot_dimension_numbers<[2], [2], [1], [1], [0, 0, 0, 1, 1, 1], [0], [0]>} : vector<4x8x16xbf16>, vector<4x8x16xbf16>, vector<4x8x8xf32> -> vector<4x8x8xf32>
    "tpu.trace_stop"() : () -> ()
    %104 = arith.truncf %103 : vector<4x8x8xf32> to vector<4x8x8xbf16>
    "tpu.trace_start"() <{level = 10 : i32, message = "hqd,hdc->hqc"}> : () -> ()
    %cst_51 = arith.constant dense<0.000000e+00> : vector<4x8x32xf32>
    %105 = tpu.matmul %104, %87, %cst_51 {dimension_numbers = #tpu.dot_dimension_numbers<[2], [1], [1], [2], [0, 0, 0, 1, 1, 2], [0], [0]>} : vector<4x8x8xbf16>, vector<4x8x32xbf16>, vector<4x8x32xf32> -> vector<4x8x32xf32>
    "tpu.trace_stop"() : () -> ()
    %cst_52 = arith.constant dense<0.000000e+00> : vector<8x32xf32>
    %106 = vector.multi_reduction <add>, %105, %cst_52 [0] : vector<4x8x32xf32> to vector<8x32xf32>
    %107 = vector.broadcast %88 : vector<1x32xf32> to vector<8x32xf32>
    %108 = arith.addf %106, %107 : vector<8x32xf32>
    %109 = arith.addf %64, %108 : vector<8x32xf32>
    %c0_53 = arith.constant 0 : index
    %c0_54 = arith.constant 0 : index
    %110 = vector.load %arg20[%c0_53, %c0_54] : memref<1x32xf32, #tpu.memory_space<vmem>>, vector<1x32xf32>
    %c0_55 = arith.constant 0 : index
    %c0_56 = arith.constant 0 : index
    %111 = vector.load %arg21[%c0_55, %c0_56] : memref<1x32xf32, #tpu.memory_space<vmem>>, vector<1x32xf32>
    %cst_57 = arith.constant dense<0.000000e+00> : vector<8xf32>
    %112 = vector.multi_reduction <add>, %109, %cst_57 [1] : vector<8x32xf32> to vector<8xf32>
    %113 = vector.shape_cast %112 : vector<8xf32> to vector<8x1xf32>
    %cst_58 = arith.constant 3.200000e+01 : f32
    %114 = vector.broadcast %cst_58 : f32 to vector<8x1xf32>
    %115 = arith.divf %113, %114 : vector<8x1xf32>
    %116 = vector.broadcast %115 : vector<8x1xf32> to vector<8x32xf32>
    %117 = arith.subf %109, %116 : vector<8x32xf32>
    %118 = arith.mulf %117, %117 : vector<8x32xf32>
    %cst_59 = arith.constant dense<0.000000e+00> : vector<8xf32>
    %119 = vector.multi_reduction <add>, %118, %cst_59 [1] : vector<8x32xf32> to vector<8xf32>
    %120 = vector.shape_cast %119 : vector<8xf32> to vector<8x1xf32>
    %cst_60 = arith.constant 3.200000e+01 : f32
    %121 = vector.broadcast %cst_60 : f32 to vector<8x1xf32>
    %122 = arith.divf %120, %121 : vector<8x1xf32>
    %cst_61 = arith.constant 9.99999974E-6 : f32
    %123 = vector.broadcast %cst_61 : f32 to vector<8x1xf32>
    %124 = arith.addf %122, %123 : vector<8x1xf32>
    %125 = math.rsqrt %124 : vector<8x1xf32>
    %126 = vector.broadcast %125 : vector<8x1xf32> to vector<8x32xf32>
    %127 = arith.mulf %117, %126 : vector<8x32xf32>
    %128 = vector.broadcast %110 : vector<1x32xf32> to vector<8x32xf32>
    %129 = arith.mulf %127, %128 : vector<8x32xf32>
    %130 = vector.broadcast %111 : vector<1x32xf32> to vector<8x32xf32>
    %131 = arith.addf %129, %130 : vector<8x32xf32>
    %132 = arith.truncf %131 : vector<8x32xf32> to vector<8x32xbf16>
    %c0_62 = arith.constant 0 : index
    %c0_63 = arith.constant 0 : index
    %133 = vector.load %arg14[%c0_62, %c0_63] : memref<32x64xbf16, #tpu.memory_space<vmem>>, vector<32x64xbf16>
    %cst_64 = arith.constant dense<0.000000e+00> : vector<8x64xf32>
    %134 = tpu.matmul %132, %133, %cst_64 {dimension_numbers = #tpu.dot_dimension_numbers<[1], [0], [0], [1], [0, 0, 1, 1], [], []>} : vector<8x32xbf16>, vector<32x64xbf16>, vector<8x64xf32> -> vector<8x64xf32>
    %c0_65 = arith.constant 0 : index
    %c0_66 = arith.constant 0 : index
    %135 = vector.load %arg15[%c0_65, %c0_66] : memref<1x64xf32, #tpu.memory_space<vmem>>, vector<1x64xf32>
    %136 = vector.broadcast %135 : vector<1x64xf32> to vector<8x64xf32>
    %137 = arith.addf %134, %136 : vector<8x64xf32>
    %cst_67 = arith.constant 0.000000e+00 : f32
    %138 = vector.broadcast %cst_67 : f32 to vector<8x64xf32>
    %139 = arith.maximumf %137, %138 : vector<8x64xf32>
    %140 = arith.truncf %139 : vector<8x64xf32> to vector<8x64xbf16>
    %c0_68 = arith.constant 0 : index
    %c0_69 = arith.constant 0 : index
    %141 = vector.load %arg16[%c0_68, %c0_69] : memref<64x32xbf16, #tpu.memory_space<vmem>>, vector<64x32xbf16>
    %cst_70 = arith.constant dense<0.000000e+00> : vector<8x32xf32>
    %142 = tpu.matmul %140, %141, %cst_70 {dimension_numbers = #tpu.dot_dimension_numbers<[1], [0], [0], [1], [0, 0, 1, 1], [], []>} : vector<8x64xbf16>, vector<64x32xbf16>, vector<8x32xf32> -> vector<8x32xf32>
    %c0_71 = arith.constant 0 : index
    %c0_72 = arith.constant 0 : index
    %143 = vector.load %arg17[%c0_71, %c0_72] : memref<1x32xf32, #tpu.memory_space<vmem>>, vector<1x32xf32>
    %144 = vector.broadcast %143 : vector<1x32xf32> to vector<8x32xf32>
    %145 = arith.addf %142, %144 : vector<8x32xf32>
    %146 = arith.addf %131, %145 : vector<8x32xf32>
    %c0_73 = arith.constant 0 : index
    %c0_74 = arith.constant 0 : index
    %147 = vector.load %arg22[%c0_73, %c0_74] : memref<1x32xf32, #tpu.memory_space<vmem>>, vector<1x32xf32>
    %c0_75 = arith.constant 0 : index
    %c0_76 = arith.constant 0 : index
    %148 = vector.load %arg23[%c0_75, %c0_76] : memref<1x32xf32, #tpu.memory_space<vmem>>, vector<1x32xf32>
    %cst_77 = arith.constant dense<0.000000e+00> : vector<8xf32>
    %149 = vector.multi_reduction <add>, %146, %cst_77 [1] : vector<8x32xf32> to vector<8xf32>
    %150 = vector.shape_cast %149 : vector<8xf32> to vector<8x1xf32>
    %cst_78 = arith.constant 3.200000e+01 : f32
    %151 = vector.broadcast %cst_78 : f32 to vector<8x1xf32>
    %152 = arith.divf %150, %151 : vector<8x1xf32>
    %153 = vector.broadcast %152 : vector<8x1xf32> to vector<8x32xf32>
    %154 = arith.subf %146, %153 : vector<8x32xf32>
    %155 = arith.mulf %154, %154 : vector<8x32xf32>
    %cst_79 = arith.constant dense<0.000000e+00> : vector<8xf32>
    %156 = vector.multi_reduction <add>, %155, %cst_79 [1] : vector<8x32xf32> to vector<8xf32>
    %157 = vector.shape_cast %156 : vector<8xf32> to vector<8x1xf32>
    %cst_80 = arith.constant 3.200000e+01 : f32
    %158 = vector.broadcast %cst_80 : f32 to vector<8x1xf32>
    %159 = arith.divf %157, %158 : vector<8x1xf32>
    %cst_81 = arith.constant 9.99999974E-6 : f32
    %160 = vector.broadcast %cst_81 : f32 to vector<8x1xf32>
    %161 = arith.addf %159, %160 : vector<8x1xf32>
    %162 = math.rsqrt %161 : vector<8x1xf32>
    %163 = vector.broadcast %162 : vector<8x1xf32> to vector<8x32xf32>
    %164 = arith.mulf %154, %163 : vector<8x32xf32>
    %165 = vector.broadcast %147 : vector<1x32xf32> to vector<8x32xf32>
    %166 = arith.mulf %164, %165 : vector<8x32xf32>
    %167 = vector.broadcast %148 : vector<1x32xf32> to vector<8x32xf32>
    %168 = arith.addf %166, %167 : vector<8x32xf32>
    %c0_82 = arith.constant 0 : index
    %c0_83 = arith.constant 0 : index
    %169 = vector.load %arg24[%c0_82, %c0_83] : memref<8x32xf32, #tpu.memory_space<vmem>>, vector<8x32xf32>
    tpu.vector_store %arg24[%c0_82, %c0_83], %168 {strides = array<i32>} : memref<8x32xf32, #tpu.memory_space<vmem>>, vector<8x32xf32>,
    return
  }
  func.func @transform_0(%arg0: i32) -> (i32, i32) {
    %c0_i32 = arith.constant 0 : i32
    %c0_i32_0 = arith.constant 0 : i32
    return %arg0, %c0_i32 : i32, i32
  }
  func.func @transform_1(%arg0: i32) -> (i32, i32) {
    %c0_i32 = arith.constant 0 : i32
    %c0_i32_0 = arith.constant 0 : i32
    return %arg0, %c0_i32 : i32, i32
  }
  func.func @transform_2(%arg0: i32) -> (i32, i32, i32) {
    %c0_i32 = arith.constant 0 : i32
    %c0_i32_0 = arith.constant 0 : i32
    %c0_i32_1 = arith.constant 0 : i32
    return %arg0, %c0_i32, %c0_i32_0 : i32, i32, i32
  }
  func.func @transform_3(%arg0: i32) -> (i32, i32) {
    %c0_i32 = arith.constant 0 : i32
    %c0_i32_0 = arith.constant 0 : i32
    %c0_i32_1 = arith.constant 0 : i32
    return %c0_i32, %c0_i32_0 : i32, i32
  }
  func.func @transform_4(%arg0: i32) -> (i32, i32) {
    %c0_i32 = arith.constant 0 : i32
    %c0_i32_0 = arith.constant 0 : i32
    %c0_i32_1 = arith.constant 0 : i32
    return %c0_i32, %c0_i32_0 : i32, i32
  }
  func.func @transform_5(%arg0: i32) -> (i32, i32, i32) {
    %c0_i32 = arith.constant 0 : i32
    %c0_i32_0 = arith.constant 0 : i32
    %c0_i32_1 = arith.constant 0 : i32
    %c0_i32_2 = arith.constant 0 : i32
    return %c0_i32, %c0_i32_0, %c0_i32_1 : i32, i32, i32
  }
  func.func @transform_6(%arg0: i32) -> (i32, i32) {
    %c0_i32 = arith.constant 0 : i32
    %c0_i32_0 = arith.constant 0 : i32
    %c0_i32_1 = arith.constant 0 : i32
    return %c0_i32, %c0_i32_0 : i32, i32
  }
  func.func @transform_7(%arg0: i32) -> (i32, i32) {
    %c0_i32 = arith.constant 0 : i32
    %c0_i32_0 = arith.constant 0 : i32
    %c0_i32_1 = arith.constant 0 : i32
    return %c0_i32, %c0_i32_0 : i32, i32
  }
  func.func @transform_8(%arg0: i32) -> (i32, i32) {
    %c0_i32 = arith.constant 0 : i32
    %c0_i32_0 = arith.constant 0 : i32
    %c0_i32_1 = arith.constant 0 : i32
    return %c0_i32, %c0_i32_0 : i32, i32
  }
  func.func @transform_9(%arg0: i32) -> (i32, i32) {
    %c0_i32 = arith.constant 0 : i32
    %c0_i32_0 = arith.constant 0 : i32
    %c0_i32_1 = arith.constant 0 : i32
    return %c0_i32, %c0_i32_0 : i32, i32
  }
  func.func @transform_10(%arg0: i32) -> (i32, i32) {
    %c0_i32 = arith.constant 0 : i32
    %c0_i32_0 = arith.constant 0 : i32
    %c0_i32_1 = arith.constant 0 : i32
    return %c0_i32, %c0_i32_0 : i32, i32
  }
  func.func @transform_11(%arg0: i32) -> (i32, i32, i32) {
    %c0_i32 = arith.constant 0 : i32
    %c0_i32_0 = arith.constant 0 : i32
    %c0_i32_1 = arith.constant 0 : i32
    %c0_i32_2 = arith.constant 0 : i32
    return %c0_i32, %c0_i32_0, %c0_i32_1 : i32, i32, i32
  }
  func.func @transform_12(%arg0: i32) -> (i32, i32) {
    %c0_i32 = arith.constant 0 : i32
    %c0_i32_0 = arith.constant 0 : i32
    %c0_i32_1 = arith.constant 0 : i32
    return %c0_i32, %c0_i32_0 : i32, i32
  }
  func.func @transform_13(%arg0: i32) -> (i32, i32) {
    %c0_i32 = arith.constant 0 : i32
    %c0_i32_0 = arith.constant 0 : i32
    %c0_i32_1 = arith.constant 0 : i32
    return %c0_i32, %c0_i32_0 : i32, i32
  }
  func.func @transform_14(%arg0: i32) -> (i32, i32) {
    %c0_i32 = arith.constant 0 : i32
    %c0_i32_0 = arith.constant 0 : i32
    %c0_i32_1 = arith.constant 0 : i32
    return %c0_i32, %c0_i32_0 : i32, i32
  }
  func.func @transform_15(%arg0: i32) -> (i32, i32) {
    %c0_i32 = arith.constant 0 : i32
    %c0_i32_0 = arith.constant 0 : i32
    %c0_i32_1 = arith.constant 0 : i32
    return %c0_i32, %c0_i32_0 : i32, i32
  }
  func.func @transform_16(%arg0: i32) -> (i32, i32) {
    %c0_i32 = arith.constant 0 : i32
    %c0_i32_0 = arith.constant 0 : i32
    %c0_i32_1 = arith.constant 0 : i32
    return %c0_i32, %c0_i32_0 : i32, i32
  }
  func.func @transform_17(%arg0: i32) -> (i32, i32) {
    %c0_i32 = arith.constant 0 : i32
    %c0_i32_0 = arith.constant 0 : i32
    %c0_i32_1 = arith.constant 0 : i32
    return %c0_i32, %c0_i32_0 : i32, i32
  }
  func.func @transform_18(%arg0: i32) -> (i32, i32) {
    %c0_i32 = arith.constant 0 : i32
    %c0_i32_0 = arith.constant 0 : i32
    %c0_i32_1 = arith.constant 0 : i32
    return %c0_i32, %c0_i32_0 : i32, i32
  }
  func.func @transform_19(%arg0: i32) -> (i32, i32) {
    %c0_i32 = arith.constant 0 : i32
    %c0_i32_0 = arith.constant 0 : i32
    %c0_i32_1 = arith.constant 0 : i32
    return %c0_i32, %c0_i32_0 : i32, i32
  }
  func.func @transform_20(%arg0: i32) -> (i32, i32) {
    %c0_i32 = arith.constant 0 : i32
    %c0_i32_0 = arith.constant 0 : i32
    %c0_i32_1 = arith.constant 0 : i32
    return %c0_i32, %c0_i32_0 : i32, i32
  }
  func.func @transform_21(%arg0: i32) -> (i32, i32) {
    %c0_i32 = arith.constant 0 : i32
    %c0_i32_0 = arith.constant 0 : i32
    %c0_i32_1 = arith.constant 0 : i32
    return %c0_i32, %c0_i32_0 : i32, i32
  }
  func.func @transform_22(%arg0: i32) -> (i32, i32) {
    %c0_i32 = arith.constant 0 : i32
    %c0_i32_0 = arith.constant 0 : i32
    %c0_i32_1 = arith.constant 0 : i32
    return %c0_i32, %c0_i32_0 : i32, i32
  }
  func.func @transform_23(%arg0: i32) -> (i32, i32) {
    %c0_i32 = arith.constant 0 : i32
    %c0_i32_0 = arith.constant 0 : i32
    return %arg0, %c0_i32 : i32, i32
  }
}

</mosaic_0001>

<llo_original>
// kernel: tpu_custom_call.1
$region0: #{tpu_custom_call.1}
  #allocation0 [shape = 'u32[]', space=smem, size = 0x4, offset = 0x4, fixed_abs, tag = 'smem constant byte address 0x4 - core index']
  #allocation1 [shape = 'u32[72,128]{1,0:T(1,128)}', space=vmem, size = 0x9000, scoped, tag = 'internal scratch']
  %s0 = inlined_call_operand.vmem [shape: f32[16,32], index: 0, kind: input, shape index: {}]
  %s1 = inlined_call_operand.vmem [shape: f32[32,32], index: 1, kind: input, shape index: {}]
  %s2 = inlined_call_operand.hbm [shape: f32[2,1,8], index: 2, kind: input, shape index: {}]
  %s3 = inlined_call_operand.hbm [shape: bf16[32,96], index: 3, kind: input, shape index: {}]
  %s4 = inlined_call_operand.vmem [shape: f32[1,96], index: 4, kind: input, shape index: {}]
  %s5 = inlined_call_operand.hbm [shape: bf16[4,8,32], index: 5, kind: input, shape index: {}]
  %s6 = inlined_call_operand.vmem [shape: f32[1,32], index: 6, kind: input, shape index: {}]
  %s7 = inlined_call_operand.hbm [shape: bf16[32,32], index: 7, kind: input, shape index: {}]
  %s8 = inlined_call_operand.vmem [shape: f32[1,32], index: 8, kind: input, shape index: {}]
  %s9 = inlined_call_operand.hbm [shape: bf16[32,64], index: 9, kind: input, shape index: {}]
  %s10 = inlined_call_operand.vmem [shape: f32[1,64], index: 10, kind: input, shape index: {}]
  %s11 = inlined_call_operand.hbm [shape: bf16[4,8,32], index: 11, kind: input, shape index: {}]
  %s12 = inlined_call_operand.vmem [shape: f32[1,32], index: 12, kind: input, shape index: {}]
  %s13 = inlined_call_operand.hbm [shape: bf16[32,64], index: 13, kind: input, shape index: {}]
  %s14 = inlined_call_operand.vmem [shape: f32[1,64], index: 14, kind: input, shape index: {}]
  %s15 = inlined_call_operand.vmem [shape: bf16[64,32], index: 15, kind: input, shape index: {}]
  %s16 = inlined_call_operand.vmem [shape: f32[1,32], index: 16, kind: input, shape index: {}]
  %s17 = inlined_call_operand.vmem [shape: f32[1,32], index: 17, kind: input, shape index: {}]
  %s18 = inlined_call_operand.vmem [shape: f32[1,32], index: 18, kind: input, shape index: {}]
  %s19 = inlined_call_operand.vmem [shape: f32[1,32], index: 19, kind: input, shape index: {}]
  %s20 = inlined_call_operand.vmem [shape: f32[1,32], index: 20, kind: input, shape index: {}]
  %s21 = inlined_call_operand.vmem [shape: f32[1,32], index: 21, kind: input, shape index: {}]
  %s22 = inlined_call_operand.vmem [shape: f32[1,32], index: 22, kind: input, shape index: {}]
  %s23 = inlined_call_operand.hbm [shape: f32[16,32], index: 23, kind: output, shape index: {}]
  %s24 = sld [smem:[#allocation0]]
  $region153: #{tpu_custom_call.1} parent=0
    _
  %s26 = ssub.s32 1, %s24
  %s27 = scalar_select 0, %s26, %s24
  $region1: #{tpu_custom_call.1} parent=0
    #allocation2 [shape = 'u8[1024]{0}', space=vmem, size = 0x400, scoped, tag = 'input window, operand 2']
    #allocation3 [shape = 's32[2]{0}', space=sflag, size = 0x8, scoped, tag = 'scoped memory for tpu_custom_call.1']
    #allocation4 [shape = 's32[2]{0}', space=sflag, size = 0x8, scoped, tag = 'scoped memory for tpu_custom_call.1']
    #allocation5 [shape = 'u8[8192]{0}', space=vmem, size = 0x2000, scoped, tag = 'input window, operand 3, single buffered']
    #allocation6 [shape = 's32[1]{0}', space=sflag, size = 0x4, scoped, tag = 'scoped memory for tpu_custom_call.1']
    #allocation7 [shape = 'u8[8192]{0}', space=vmem, size = 0x2000, scoped, tag = 'input window, operand 5, single buffered']
    #allocation8 [shape = 'u8[8192]{0}', space=vmem, size = 0x2000, scoped, tag = 'input window, operand 7, single buffered']
    #allocation9 [shape = 's32[1]{0}', space=sflag, size = 0x4, scoped, tag = 'scoped memory for tpu_custom_call.1']
    #allocation10 [shape = 'u8[8192]{0}', space=vmem, size = 0x2000, scoped, tag = 'input window, operand 9, single buffered']
    #allocation11 [shape = 'u8[8192]{0}', space=vmem, size = 0x2000, scoped, tag = 'input window, operand 11, single buffered']
    #allocation12 [shape = 's32[1]{0}', space=sflag, size = 0x4, scoped, tag = 'scoped memory for tpu_custom_call.1']
    #allocation13 [shape = 'u8[8192]{0}', space=vmem, size = 0x2000, scoped, tag = 'input window, operand 13, single buffered']
    #allocation14 [shape = 'u8[8192]{0}', space=vmem, size = 0x2000, scoped, tag = 'output window, operand 0']
    %28 = vsyncpa [#allocation3], 0
    %s29 = scalar_lea.sflag [#allocation3], 1
    %30 = vsyncpa %s29, 0
    %31 = vsyncpa [#allocation6], 0
    %32 = vsyncpa [#allocation9], 0
    %33 = vsyncpa [#allocation12], 0
    %34 = vsyncpa [#allocation4], 0
    %s35 = scalar_lea.sflag [#allocation4], 1
    %36 = vsyncpa %s35, 0
    loop: start=0, step=1, limit=4
    $region2: #{tpu_custom_call.1} parent=1 // loop_pre_header
      _
    $region3: #{tpu_custom_call.1} parent=1 // loop_header
      %s38 = sphi 0, %s42
      %p39 = scmp.ge.s32.totalorder %s38, 4
      %s48 = sphi 0, %s50
      %s51 = sphi 0, %s48
      %s52 = sphi 0, %s51
      %s68 = sphi 0, %s52
      %s74 = sphi 0, %s76
      %s77 = sphi 0, %s74
      %s78 = sphi 0, %s77
      %s94 = sphi 0, %s78
      %s100 = sphi 0, %s102
      %s103 = sphi 0, %s100
      %s104 = sphi 0, %s103
      %s120 = sphi 0, %s104
      %s124 = sphi 0, %s124
      %s126 = sphi 0, %s124
      %s127 = sphi 0, %s126
      %s141 = sphi 0, %s127
      %s145 = sphi 0, %s145
      %s147 = sphi 0, %s145
      %s148 = sphi 0, %s147
      %s162 = sphi 0, %s148
      %s166 = sphi 0, %s166
      %s168 = sphi 0, %s166
      %s169 = sphi 0, %s168
      %s183 = sphi 0, %s169
      %s187 = sphi 0, %s187
      %s189 = sphi 0, %s187
      %s190 = sphi 0, %s189
      %s204 = sphi 0, %s190
      %s208 = sphi 0, %s208
      %s210 = sphi 0, %s208
      %s211 = sphi 0, %s210
      %s225 = sphi 0, %s211
      %s229 = sphi 0, %s229
      %s231 = sphi 0, %s229
      %s232 = sphi 0, %s231
      %s246 = sphi 0, %s232
      %s250 = sphi 0, %s250
      %s252 = sphi 0, %s250
      %s253 = sphi 0, %s252
      %s267 = sphi 0, %s253
      %s271 = sphi 0, %s271
      %s273 = sphi 0, %s271
      %s274 = sphi 0, %s273
      %s288 = sphi 0, %s274
      %s292 = sphi 0, %s292
      %s294 = sphi 0, %s292
      %s295 = sphi 0, %s294
      %s309 = sphi 0, %s295
      %s313 = sphi 0, %s313
      %s315 = sphi 0, %s313
      %s316 = sphi 0, %s315
      %s330 = sphi 0, %s316
      %s334 = sphi 0, %s334
      %s336 = sphi 0, %s334
      %s337 = sphi 0, %s336
      %s351 = sphi 0, %s337
      %s355 = sphi 0, %s355
      %s357 = sphi 0, %s355
      %s358 = sphi 0, %s357
      %s372 = sphi 0, %s358
      %s376 = sphi 0, %s376
      %s378 = sphi 0, %s376
      %s379 = sphi 0, %s378
      %s393 = sphi 0, %s379
      %s397 = sphi 0, %s397
      %s399 = sphi 0, %s397
      %s400 = sphi 0, %s399
      %s414 = sphi 0, %s400
      %s418 = sphi 0, %s418
      %s420 = sphi 0, %s418
      %s421 = sphi 0, %s420
      %s435 = sphi 0, %s421
      %s439 = sphi 0, %s439
      %s441 = sphi 0, %s439
      %s442 = sphi 0, %s441
      %s456 = sphi 0, %s442
      %s460 = sphi 0, %s460
      %s462 = sphi 0, %s460
      %s463 = sphi 0, %s462
      %s477 = sphi 0, %s463
      %s481 = sphi 0, %s481
      %s483 = sphi 0, %s481
      %s484 = sphi 0, %s483
      %s498 = sphi 0, %s484
      %s502 = sphi 0, %s502
      %s504 = sphi 0, %s502
      %s505 = sphi 0, %s504
      %s519 = sphi 0, %s505
      %s523 = sphi 0, %s523
      %s525 = sphi 0, %s523
      %s526 = sphi 0, %s525
      %s540 = sphi 0, %s526
      %s546 = sphi 0, %s548
      %s549 = sphi 0, %s546
      %s550 = sphi 0, %s549
      %s566 = sphi 0, %s550
    $region4: #{tpu_custom_call.1} parent=1 // loop_header_branch
      %41 = sbr.rel (%p39) target = $region8
    $region5: #{tpu_custom_call.1} parent=1 // loop_body
      %s43 = ssub.s32 %s38, 1
      %s44 = ssub.s32 %s38, 2
      %s45 = sadd.s32 %s38, 1
      %s46 = ssub.s32 %s38, %s45
      %p47 = scmp.eq.s32.totalorder %s46, 0
      %s49 = sadd.s32 %s48, 1
      %s50 = scalar_select %p47, %s48, %s49
      %p53 = pneg %p47
      %p54 = scmp.eq.s32.totalorder %s38, 1
      %p55 = por %p53, %p54
      %p56 = scmp.ne.s32.totalorder %s48, %s51
      %p57 = scmp.eq.s32.totalorder %s38, 0
      %p58 = por %p56, %p57
      %p59 = scmp.ne.s32.totalorder %s48, %s51
      %p60 = scmp.eq.s32.totalorder %s43, 1
      %p61 = por %p59, %p60
      %p62 = scmp.ne.s32.totalorder %s51, %s52
      %p63 = scmp.eq.s32.totalorder %s43, 0
      %p64 = por %p62, %p63
      %p65 = scmp.ne.s32.totalorder %s51, %s52
      %p66 = scmp.eq.s32.totalorder %s44, 1
      %p67 = por %p65, %p66
      %p69 = scmp.ne.s32.totalorder %s52, %s68
      %p70 = scmp.eq.s32.totalorder %s44, 0
      %p71 = por %p69, %p70
      %s72 = ssub.s32 %s38, %s45
      %p73 = scmp.eq.s32.totalorder %s72, 0
      %s75 = sadd.s32 %s74, 1
      %s76 = scalar_select %p73, %s74, %s75
      %p79 = pneg %p73
      %p80 = scmp.eq.s32.totalorder %s38, 1
      %p81 = por %p79, %p80
      %p82 = scmp.ne.s32.totalorder %s74, %s77
      %p83 = scmp.eq.s32.totalorder %s38, 0
      %p84 = por %p82, %p83
      %p85 = scmp.ne.s32.totalorder %s74, %s77
      %p86 = scmp.eq.s32.totalorder %s43, 1
      %p87 = por %p85, %p86
      %p88 = scmp.ne.s32.totalorder %s77, %s78
      %p89 = scmp.eq.s32.totalorder %s43, 0
      %p90 = por %p88, %p89
      %p91 = scmp.ne.s32.totalorder %s77, %s78
      %p92 = scmp.eq.s32.totalorder %s44, 1
      %p93 = por %p91, %p92
      %p95 = scmp.ne.s32.totalorder %s78, %s94
      %p96 = scmp.eq.s32.totalorder %s44, 0
      %p97 = por %p95, %p96
      %s98 = ssub.s32 %s38, %s45
      %p99 = scmp.eq.s32.totalorder %s98, 0
      %s101 = sadd.s32 %s100, 1
      %s102 = scalar_select %p99, %s100, %s101
      %p105 = pneg %p99
      %p106 = scmp.eq.s32.totalorder %s38, 1
      %p107 = por %p105, %p106
      %p108 = scmp.ne.s32.totalorder %s100, %s103
      %p109 = scmp.eq.s32.totalorder %s38, 0
      %p110 = por %p108, %p109
      %p111 = scmp.ne.s32.totalorder %s100, %s103
      %p112 = scmp.eq.s32.totalorder %s43, 1
      %p113 = por %p111, %p112
      %p114 = scmp.ne.s32.totalorder %s103, %s104
      %p115 = scmp.eq.s32.totalorder %s43, 0
      %p116 = por %p114, %p115
      %p117 = scmp.ne.s32.totalorder %s103, %s104
      %p118 = scmp.eq.s32.totalorder %s44, 1
      %p119 = por %p117, %p118
      %p121 = scmp.ne.s32.totalorder %s104, %s120
      %p122 = scmp.eq.s32.totalorder %s44, 0
      %p123 = por %p121, %p122
      %s125 = sadd.s32 %s124, 1
      %p128 = scmp.eq.s32.totalorder %s38, 1
      %p129 = scmp.ne.s32.totalorder %s124, %s126
      %p130 = scmp.eq.s32.totalorder %s38, 0
      %p131 = por %p129, %p130
      %p132 = scmp.ne.s32.totalorder %s124, %s126
      %p133 = scmp.eq.s32.totalorder %s43, 1
      %p134 = por %p132, %p133
      %p135 = scmp.ne.s32.totalorder %s126, %s127
      %p136 = scmp.eq.s32.totalorder %s43, 0
      %p137 = por %p135, %p136
      %p138 = scmp.ne.s32.totalorder %s126, %s127
      %p139 = scmp.eq.s32.totalorder %s44, 1
      %p140 = por %p138, %p139
      %p142 = scmp.ne.s32.totalorder %s127, %s141
      %p143 = scmp.eq.s32.totalorder %s44, 0
      %p144 = por %p142, %p143
      %s146 = sadd.s32 %s145, 1
      %p149 = scmp.eq.s32.totalorder %s38, 1
      %p150 = scmp.ne.s32.totalorder %s145, %s147
      %p151 = scmp.eq.s32.totalorder %s38, 0
      %p152 = por %p150, %p151
      %p153 = scmp.ne.s32.totalorder %s145, %s147
      %p154 = scmp.eq.s32.totalorder %s43, 1
      %p155 = por %p153, %p154
      %p156 = scmp.ne.s32.totalorder %s147, %s148
      %p157 = scmp.eq.s32.totalorder %s43, 0
      %p158 = por %p156, %p157
      %p159 = scmp.ne.s32.totalorder %s147, %s148
      %p160 = scmp.eq.s32.totalorder %s44, 1
      %p161 = por %p159, %p160
      %p163 = scmp.ne.s32.totalorder %s148, %s162
      %p164 = scmp.eq.s32.totalorder %s44, 0
      %p165 = por %p163, %p164
      %s167 = sadd.s32 %s166, 1
      %p170 = scmp.eq.s32.totalorder %s38, 1
      %p171 = scmp.ne.s32.totalorder %s166, %s168
      %p172 = scmp.eq.s32.totalorder %s38, 0
      %p173 = por %p171, %p172
      %p174 = scmp.ne.s32.totalorder %s166, %s168
      %p175 = scmp.eq.s32.totalorder %s43, 1
      %p176 = por %p174, %p175
      %p177 = scmp.ne.s32.totalorder %s168, %s169
      %p178 = scmp.eq.s32.totalorder %s43, 0
      %p179 = por %p177, %p178
      %p180 = scmp.ne.s32.totalorder %s168, %s169
      %p181 = scmp.eq.s32.totalorder %s44, 1
      %p182 = por %p180, %p181
      %p184 = scmp.ne.s32.totalorder %s169, %s183
      %p185 = scmp.eq.s32.totalorder %s44, 0
      %p186 = por %p184, %p185
      %s188 = sadd.s32 %s187, 1
      %p191 = scmp.eq.s32.totalorder %s38, 1
      %p192 = scmp.ne.s32.totalorder %s187, %s189
      %p193 = scmp.eq.s32.totalorder %s38, 0
      %p194 = por %p192, %p193
      %p195 = scmp.ne.s32.totalorder %s187, %s189
      %p196 = scmp.eq.s32.totalorder %s43, 1
      %p197 = por %p195, %p196
      %p198 = scmp.ne.s32.totalorder %s189, %s190
      %p199 = scmp.eq.s32.totalorder %s43, 0
      %p200 = por %p198, %p199
      %p201 = scmp.ne.s32.totalorder %s189, %s190
      %p202 = scmp.eq.s32.totalorder %s44, 1
      %p203 = por %p201, %p202
      %p205 = scmp.ne.s32.totalorder %s190, %s204
      %p206 = scmp.eq.s32.totalorder %s44, 0
      %p207 = por %p205, %p206
      %s209 = sadd.s32 %s208, 1
      %p212 = scmp.eq.s32.totalorder %s38, 1
      %p213 = scmp.ne.s32.totalorder %s208, %s210
      %p214 = scmp.eq.s32.totalorder %s38, 0
      %p215 = por %p213, %p214
      %p216 = scmp.ne.s32.totalorder %s208, %s210
      %p217 = scmp.eq.s32.totalorder %s43, 1
      %p218 = por %p216, %p217
      %p219 = scmp.ne.s32.totalorder %s210, %s211
      %p220 = scmp.eq.s32.totalorder %s43, 0
      %p221 = por %p219, %p220
      %p222 = scmp.ne.s32.totalorder %s210, %s211
      %p223 = scmp.eq.s32.totalorder %s44, 1
      %p224 = por %p222, %p223
      %p226 = scmp.ne.s32.totalorder %s211, %s225
      %p227 = scmp.eq.s32.totalorder %s44, 0
      %p228 = por %p226, %p227
      %s230 = sadd.s32 %s229, 1
      %p233 = scmp.eq.s32.totalorder %s38, 1
      %p234 = scmp.ne.s32.totalorder %s229, %s231
      %p235 = scmp.eq.s32.totalorder %s38, 0
      %p236 = por %p234, %p235
      %p237 = scmp.ne.s32.totalorder %s229, %s231
      %p238 = scmp.eq.s32.totalorder %s43, 1
      %p239 = por %p237, %p238
      %p240 = scmp.ne.s32.totalorder %s231, %s232
      %p241 = scmp.eq.s32.totalorder %s43, 0
      %p242 = por %p240, %p241
      %p243 = scmp.ne.s32.totalorder %s231, %s232
      %p244 = scmp.eq.s32.totalorder %s44, 1
      %p245 = por %p243, %p244
      %p247 = scmp.ne.s32.totalorder %s232, %s246
      %p248 = scmp.eq.s32.totalorder %s44, 0
      %p249 = por %p247, %p248
      %s251 = sadd.s32 %s250, 1
      %p254 = scmp.eq.s32.totalorder %s38, 1
      %p255 = scmp.ne.s32.totalorder %s250, %s252
      %p256 = scmp.eq.s32.totalorder %s38, 0
      %p257 = por %p255, %p256
      %p258 = scmp.ne.s32.totalorder %s250, %s252
      %p259 = scmp.eq.s32.totalorder %s43, 1
      %p260 = por %p258, %p259
      %p261 = scmp.ne.s32.totalorder %s252, %s253
      %p262 = scmp.eq.s32.totalorder %s43, 0
      %p263 = por %p261, %p262
      %p264 = scmp.ne.s32.totalorder %s252, %s253
      %p265 = scmp.eq.s32.totalorder %s44, 1
      %p266 = por %p264, %p265
      %p268 = scmp.ne.s32.totalorder %s253, %s267
      %p269 = scmp.eq.s32.totalorder %s44, 0
      %p270 = por %p268, %p269
      %s272 = sadd.s32 %s271, 1
      %p275 = scmp.eq.s32.totalorder %s38, 1
      %p276 = scmp.ne.s32.totalorder %s271, %s273
      %p277 = scmp.eq.s32.totalorder %s38, 0
      %p278 = por %p276, %p277
      %p279 = scmp.ne.s32.totalorder %s271, %s273
      %p280 = scmp.eq.s32.totalorder %s43, 1
      %p281 = por %p279, %p280
      %p282 = scmp.ne.s32.totalorder %s273, %s274
      %p283 = scmp.eq.s32.totalorder %s43, 0
      %p284 = por %p282, %p283
      %p285 = scmp.ne.s32.totalorder %s273, %s274
      %p286 = scmp.eq.s32.totalorder %s44, 1
      %p287 = por %p285, %p286
      %p289 = scmp.ne.s32.totalorder %s274, %s288
      %p290 = scmp.eq.s32.totalorder %s44, 0
      %p291 = por %p289, %p290
      %s293 = sadd.s32 %s292, 1
      %p296 = scmp.eq.s32.totalorder %s38, 1
      %p297 = scmp.ne.s32.totalorder %s292, %s294
      %p298 = scmp.eq.s32.totalorder %s38, 0
      %p299 = por %p297, %p298
      %p300 = scmp.ne.s32.totalorder %s292, %s294
      %p301 = scmp.eq.s32.totalorder %s43, 1
      %p302 = por %p300, %p301
      %p303 = scmp.ne.s32.totalorder %s294, %s295
      %p304 = scmp.eq.s32.totalorder %s43, 0
      %p305 = por %p303, %p304
      %p306 = scmp.ne.s32.totalorder %s294, %s295
      %p307 = scmp.eq.s32.totalorder %s44, 1
      %p308 = por %p306, %p307
      %p310 = scmp.ne.s32.totalorder %s295, %s309
      %p311 = scmp.eq.s32.totalorder %s44, 0
      %p312 = por %p310, %p311
      %s314 = sadd.s32 %s313, 1
      %p317 = scmp.eq.s32.totalorder %s38, 1
      %p318 = scmp.ne.s32.totalorder %s313, %s315
      %p319 = scmp.eq.s32.totalorder %s38, 0
      %p320 = por %p318, %p319
      %p321 = scmp.ne.s32.totalorder %s313, %s315
      %p322 = scmp.eq.s32.totalorder %s43, 1
      %p323 = por %p321, %p322
      %p324 = scmp.ne.s32.totalorder %s315, %s316
      %p325 = scmp.eq.s32.totalorder %s43, 0
      %p326 = por %p324, %p325
      %p327 = scmp.ne.s32.totalorder %s315, %s316
      %p328 = scmp.eq.s32.totalorder %s44, 1
      %p329 = por %p327, %p328
      %p331 = scmp.ne.s32.totalorder %s316, %s330
      %p332 = scmp.eq.s32.totalorder %s44, 0
      %p333 = por %p331, %p332
      %s335 = sadd.s32 %s334, 1
      %p338 = scmp.eq.s32.totalorder %s38, 1
      %p339 = scmp.ne.s32.totalorder %s334, %s336
      %p340 = scmp.eq.s32.totalorder %s38, 0
      %p341 = por %p339, %p340
      %p342 = scmp.ne.s32.totalorder %s334, %s336
      %p343 = scmp.eq.s32.totalorder %s43, 1
      %p344 = por %p342, %p343
      %p345 = scmp.ne.s32.totalorder %s336, %s337
      %p346 = scmp.eq.s32.totalorder %s43, 0
      %p347 = por %p345, %p346
      %p348 = scmp.ne.s32.totalorder %s336, %s337
      %p349 = scmp.eq.s32.totalorder %s44, 1
      %p350 = por %p348, %p349
      %p352 = scmp.ne.s32.totalorder %s337, %s351
      %p353 = scmp.eq.s32.totalorder %s44, 0
      %p354 = por %p352, %p353
      %s356 = sadd.s32 %s355, 1
      %p359 = scmp.eq.s32.totalorder %s38, 1
      %p360 = scmp.ne.s32.totalorder %s355, %s357
      %p361 = scmp.eq.s32.totalorder %s38, 0
      %p362 = por %p360, %p361
      %p363 = scmp.ne.s32.totalorder %s355, %s357
      %p364 = scmp.eq.s32.totalorder %s43, 1
      %p365 = por %p363, %p364
      %p366 = scmp.ne.s32.totalorder %s357, %s358
      %p367 = scmp.eq.s32.totalorder %s43, 0
      %p368 = por %p366, %p367
      %p369 = scmp.ne.s32.totalorder %s357, %s358
      %p370 = scmp.eq.s32.totalorder %s44, 1
      %p371 = por %p369, %p370
      %p373 = scmp.ne.s32.totalorder %s358, %s372
      %p374 = scmp.eq.s32.totalorder %s44, 0
      %p375 = por %p373, %p374
      %s377 = sadd.s32 %s376, 1
      %p380 = scmp.eq.s32.totalorder %s38, 1
      %p381 = scmp.ne.s32.totalorder %s376, %s378
      %p382 = scmp.eq.s32.totalorder %s38, 0
      %p383 = por %p381, %p382
      %p384 = scmp.ne.s32.totalorder %s376, %s378
      %p385 = scmp.eq.s32.totalorder %s43, 1
      %p386 = por %p384, %p385
      %p387 = scmp.ne.s32.totalorder %s378, %s379
      %p388 = scmp.eq.s32.totalorder %s43, 0
      %p389 = por %p387, %p388
      %p390 = scmp.ne.s32.totalorder %s378, %s379
      %p391 = scmp.eq.s32.totalorder %s44, 1
      %p392 = por %p390, %p391
      %p394 = scmp.ne.s32.totalorder %s379, %s393
      %p395 = scmp.eq.s32.totalorder %s44, 0
      %p396 = por %p394, %p395
      %s398 = sadd.s32 %s397, 1
      %p401 = scmp.eq.s32.totalorder %s38, 1
      %p402 = scmp.ne.s32.totalorder %s397, %s399
      %p403 = scmp.eq.s32.totalorder %s38, 0
      %p404 = por %p402, %p403
      %p405 = scmp.ne.s32.totalorder %s397, %s399
      %p406 = scmp.eq.s32.totalorder %s43, 1
      %p407 = por %p405, %p406
      %p408 = scmp.ne.s32.totalorder %s399, %s400
      %p409 = scmp.eq.s32.totalorder %s43, 0
      %p410 = por %p408, %p409
      %p411 = scmp.ne.s32.totalorder %s399, %s400
      %p412 = scmp.eq.s32.totalorder %s44, 1
      %p413 = por %p411, %p412
      %p415 = scmp.ne.s32.totalorder %s400, %s414
      %p416 = scmp.eq.s32.totalorder %s44, 0
      %p417 = por %p415, %p416
      %s419 = sadd.s32 %s418, 1
      %p422 = scmp.eq.s32.totalorder %s38, 1
      %p423 = scmp.ne.s32.totalorder %s418, %s420
      %p424 = scmp.eq.s32.totalorder %s38, 0
      %p425 = por %p423, %p424
      %p426 = scmp.ne.s32.totalorder %s418, %s420
      %p427 = scmp.eq.s32.totalorder %s43, 1
      %p428 = por %p426, %p427
      %p429 = scmp.ne.s32.totalorder %s420, %s421
      %p430 = scmp.eq.s32.totalorder %s43, 0
      %p431 = por %p429, %p430
      %p432 = scmp.ne.s32.totalorder %s420, %s421
      %p433 = scmp.eq.s32.totalorder %s44, 1
      %p434 = por %p432, %p433
      %p436 = scmp.ne.s32.totalorder %s421, %s435
      %p437 = scmp.eq.s32.totalorder %s44, 0
      %p438 = por %p436, %p437
      %s440 = sadd.s32 %s439, 1
      %p443 = scmp.eq.s32.totalorder %s38, 1
      %p444 = scmp.ne.s32.totalorder %s439, %s441
      %p445 = scmp.eq.s32.totalorder %s38, 0
      %p446 = por %p444, %p445
      %p447 = scmp.ne.s32.totalorder %s439, %s441
      %p448 = scmp.eq.s32.totalorder %s43, 1
      %p449 = por %p447, %p448
      %p450 = scmp.ne.s32.totalorder %s441, %s442
      %p451 = scmp.eq.s32.totalorder %s43, 0
      %p452 = por %p450, %p451
      %p453 = scmp.ne.s32.totalorder %s441, %s442
      %p454 = scmp.eq.s32.totalorder %s44, 1
      %p455 = por %p453, %p454
      %p457 = scmp.ne.s32.totalorder %s442, %s456
      %p458 = scmp.eq.s32.totalorder %s44, 0
      %p459 = por %p457, %p458
      %s461 = sadd.s32 %s460, 1
      %p464 = scmp.eq.s32.totalorder %s38, 1
      %p465 = scmp.ne.s32.totalorder %s460, %s462
      %p466 = scmp.eq.s32.totalorder %s38, 0
      %p467 = por %p465, %p466
      %p468 = scmp.ne.s32.totalorder %s460, %s462
      %p469 = scmp.eq.s32.totalorder %s43, 1
      %p470 = por %p468, %p469
      %p471 = scmp.ne.s32.totalorder %s462, %s463
      %p472 = scmp.eq.s32.totalorder %s43, 0
      %p473 = por %p471, %p472
      %p474 = scmp.ne.s32.totalorder %s462, %s463
      %p475 = scmp.eq.s32.totalorder %s44, 1
      %p476 = por %p474, %p475
      %p478 = scmp.ne.s32.totalorder %s463, %s477
      %p479 = scmp.eq.s32.totalorder %s44, 0
      %p480 = por %p478, %p479
      %s482 = sadd.s32 %s481, 1
      %p485 = scmp.eq.s32.totalorder %s38, 1
      %p486 = scmp.ne.s32.totalorder %s481, %s483
      %p487 = scmp.eq.s32.totalorder %s38, 0
      %p488 = por %p486, %p487
      %p489 = scmp.ne.s32.totalorder %s481, %s483
      %p490 = scmp.eq.s32.totalorder %s43, 1
      %p491 = por %p489, %p490
      %p492 = scmp.ne.s32.totalorder %s483, %s484
      %p493 = scmp.eq.s32.totalorder %s43, 0
      %p494 = por %p492, %p493
      %p495 = scmp.ne.s32.totalorder %s483, %s484
      %p496 = scmp.eq.s32.totalorder %s44, 1
      %p497 = por %p495, %p496
      %p499 = scmp.ne.s32.totalorder %s484, %s498
      %p500 = scmp.eq.s32.totalorder %s44, 0
      %p501 = por %p499, %p500
      %s503 = sadd.s32 %s502, 1
      %p506 = scmp.eq.s32.totalorder %s38, 1
      %p507 = scmp.ne.s32.totalorder %s502, %s504
      %p508 = scmp.eq.s32.totalorder %s38, 0
      %p509 = por %p507, %p508
      %p510 = scmp.ne.s32.totalorder %s502, %s504
      %p511 = scmp.eq.s32.totalorder %s43, 1
      %p512 = por %p510, %p511
      %p513 = scmp.ne.s32.totalorder %s504, %s505
      %p514 = scmp.eq.s32.totalorder %s43, 0
      %p515 = por %p513, %p514
      %p516 = scmp.ne.s32.totalorder %s504, %s505
      %p517 = scmp.eq.s32.totalorder %s44, 1
      %p518 = por %p516, %p517
      %p520 = scmp.ne.s32.totalorder %s505, %s519
      %p521 = scmp.eq.s32.totalorder %s44, 0
      %p522 = por %p520, %p521
      %s524 = sadd.s32 %s523, 1
      %p527 = scmp.eq.s32.totalorder %s38, 1
      %p528 = scmp.ne.s32.totalorder %s523, %s525
      %p529 = scmp.eq.s32.totalorder %s38, 0
      %p530 = por %p528, %p529
      %p531 = scmp.ne.s32.totalorder %s523, %s525
      %p532 = scmp.eq.s32.totalorder %s43, 1
      %p533 = por %p531, %p532
      %p534 = scmp.ne.s32.totalorder %s525, %s526
      %p535 = scmp.eq.s32.totalorder %s43, 0
      %p536 = por %p534, %p535
      %p537 = scmp.ne.s32.totalorder %s525, %s526
      %p538 = scmp.eq.s32.totalorder %s44, 1
      %p539 = por %p537, %p538
      %p541 = scmp.ne.s32.totalorder %s526, %s540
      %p542 = scmp.eq.s32.totalorder %s44, 0
      %p543 = por %p541, %p542
      %s544 = ssub.s32 %s38, %s45
      %p545 = scmp.eq.s32.totalorder %s544, 0
      %s547 = sadd.s32 %s546, 1
      %s548 = scalar_select %p545, %s546, %s547
      %p551 = pneg %p545
      %p552 = scmp.eq.s32.totalorder %s38, 1
      %p553 = por %p551, %p552
      %p554 = scmp.ne.s32.totalorder %s546, %s549
      %p555 = scmp.eq.s32.totalorder %s38, 0
      %p556 = por %p554, %p555
      %p557 = scmp.ne.s32.totalorder %s546, %s549
      %p558 = scmp.eq.s32.totalorder %s43, 1
      %p559 = por %p557, %p558
      %p560 = scmp.ne.s32.totalorder %s549, %s550
      %p561 = scmp.eq.s32.totalorder %s43, 0
      %p562 = por %p560, %p561
      %p563 = scmp.ne.s32.totalorder %s549, %s550
      %p564 = scmp.eq.s32.totalorder %s44, 1
      %p565 = por %p563, %p564
      %p567 = scmp.ne.s32.totalorder %s550, %s566
      %p568 = scmp.eq.s32.totalorder %s44, 0
      %p569 = por %p567, %p568
      %p570 = scmp.le.s32.totalorder 1, %s38
      %p571 = scmp.lt.s32.totalorder %s38, 3
      %p572 = pnand %p570, %p571
      %p573 = pneg %p572
      // Predicated region
      $region9: #{tpu_custom_call.1} parent=5 // pred_check
        _
      $region10: #{tpu_custom_call.1} parent=5 // pred_check_branch
        %575 = sbr.rel (%p572) target = $region12
      $region11: #{tpu_custom_call.1} parent=5 // pred_region
        %s576 = ssub.s32 %s38, 1
        // Predicated region
        $region13: #{tpu_custom_call.1} parent=11 // pred_check
          %p577 = pneg %p137
        $region14: #{tpu_custom_call.1} parent=11 // pred_check_branch
          %579 = sbr.rel (%p577) target = $region16
        $region15: #{tpu_custom_call.1} parent=11 // pred_region
          %581 = vsyncadd [#allocation6], 0
          %s582 = sshll.u32 %s3, 4
          %s583 = int_to_ptr.hbm [resolvable:$true] %s582
          %s584 = sshll.u32 [#allocation5], 4
          %s585 = int_to_ptr.vmem [resolvable:$true] %s584
          %590 = dma.hbm_to_vmem [thread:$0]  %s583, 256, %s585, [#allocation6], 64, 64, 4
        $region16: #{tpu_custom_call.1} parent=11 // pred_fallthru
          _
        // Predicated region
        $region17: #{tpu_custom_call.1} parent=11 // pred_check
          %p591 = pneg %p158
        $region18: #{tpu_custom_call.1} parent=11 // pred_check_branch
          %593 = sbr.rel (%p591) target = $region20
        $region19: #{tpu_custom_call.1} parent=11 // pred_region
          _
        $region20: #{tpu_custom_call.1} parent=11 // pred_fallthru
          _
        // Predicated region
        $region21: #{tpu_custom_call.1} parent=11 // pred_check
          %p594 = pneg %p179
        $region22: #{tpu_custom_call.1} parent=11 // pred_check_branch
          %596 = sbr.rel (%p594) target = $region24
        $region23: #{tpu_custom_call.1} parent=11 // pred_region
          %598 = vsyncadd [#allocation6], 0
          %s599 = sshll.u32 %s5, 4
          %s600 = int_to_ptr.hbm [resolvable:$true] %s599
          %s601 = sshll.u32 [#allocation7], 4
          %s602 = int_to_ptr.vmem [resolvable:$true] %s601
          %607 = dma.hbm_to_vmem [thread:$0]  %s600, 256, %s602, [#allocation6], 64, 64, 4
        $region24: #{tpu_custom_call.1} parent=11 // pred_fallthru
          _
        // Predicated region
        $region25: #{tpu_custom_call.1} parent=11 // pred_check
          %p608 = pneg %p200
        $region26: #{tpu_custom_call.1} parent=11 // pred_check_branch
          %610 = sbr.rel (%p608) target = $region28
        $region27: #{tpu_custom_call.1} parent=11 // pred_region
          _
        $region28: #{tpu_custom_call.1} parent=11 // pred_fallthru
          _
        // Predicated region
        $region29: #{tpu_custom_call.1} parent=11 // pred_check
          %p611 = pneg %p221
        $region30: #{tpu_custom_call.1} parent=11 // pred_check_branch
          %613 = sbr.rel (%p611) target = $region32
        $region31: #{tpu_custom_call.1} parent=11 // pred_region
          %615 = vsyncadd [#allocation9], 0
          %s616 = sshll.u32 %s7, 4
          %s617 = int_to_ptr.hbm [resolvable:$true] %s616
          %s618 = sshll.u32 [#allocation8], 4
          %s619 = int_to_ptr.vmem [resolvable:$true] %s618
          %624 = dma.hbm_to_vmem [thread:$0]  %s617, 256, %s619, [#allocation9], 64, 64, 4
        $region32: #{tpu_custom_call.1} parent=11 // pred_fallthru
          _
        // Predicated region
        $region33: #{tpu_custom_call.1} parent=11 // pred_check
          %p625 = pneg %p242
        $region34: #{tpu_custom_call.1} parent=11 // pred_check_branch
          %627 = sbr.rel (%p625) target = $region36
        $region35: #{tpu_custom_call.1} parent=11 // pred_region
          _
        $region36: #{tpu_custom_call.1} parent=11 // pred_fallthru
          _
        // Predicated region
        $region37: #{tpu_custom_call.1} parent=11 // pred_check
          %p628 = pneg %p263
        $region38: #{tpu_custom_call.1} parent=11 // pred_check_branch
          %630 = sbr.rel (%p628) target = $region40
        $region39: #{tpu_custom_call.1} parent=11 // pred_region
          %632 = vsyncadd [#allocation9], 0
          %s633 = sshll.u32 %s9, 4
          %s634 = int_to_ptr.hbm [resolvable:$true] %s633
          %s635 = sshll.u32 [#allocation10], 4
          %s636 = int_to_ptr.vmem [resolvable:$true] %s635
          %641 = dma.hbm_to_vmem [thread:$0]  %s634, 256, %s636, [#allocation9], 64, 64, 4
        $region40: #{tpu_custom_call.1} parent=11 // pred_fallthru
          _
        // Predicated region
        $region41: #{tpu_custom_call.1} parent=11 // pred_check
          %p642 = pneg %p284
        $region42: #{tpu_custom_call.1} parent=11 // pred_check_branch
          %644 = sbr.rel (%p642) target = $region44
        $region43: #{tpu_custom_call.1} parent=11 // pred_region
          _
        $region44: #{tpu_custom_call.1} parent=11 // pred_fallthru
          _
        // Predicated region
        $region45: #{tpu_custom_call.1} parent=11 // pred_check
          %p645 = pneg %p305
        $region46: #{tpu_custom_call.1} parent=11 // pred_check_branch
          %647 = sbr.rel (%p645) target = $region48
        $region47: #{tpu_custom_call.1} parent=11 // pred_region
          %649 = vsyncadd [#allocation12], 0
          %s650 = sshll.u32 %s11, 4
          %s651 = int_to_ptr.hbm [resolvable:$true] %s650
          %s652 = sshll.u32 [#allocation11], 4
          %s653 = int_to_ptr.vmem [resolvable:$true] %s652
          %658 = dma.hbm_to_vmem [thread:$0]  %s651, 256, %s653, [#allocation12], 64, 64, 4
        $region48: #{tpu_custom_call.1} parent=11 // pred_fallthru
          _
        // Predicated region
        $region49: #{tpu_custom_call.1} parent=11 // pred_check
          %p659 = pneg %p326
        $region50: #{tpu_custom_call.1} parent=11 // pred_check_branch
          %661 = sbr.rel (%p659) target = $region52
        $region51: #{tpu_custom_call.1} parent=11 // pred_region
          _
        $region52: #{tpu_custom_call.1} parent=11 // pred_fallthru
          _
        // Predicated region
        $region53: #{tpu_custom_call.1} parent=11 // pred_check
          %p662 = pneg %p347
        $region54: #{tpu_custom_call.1} parent=11 // pred_check_branch
          %664 = sbr.rel (%p662) target = $region56
        $region55: #{tpu_custom_call.1} parent=11 // pred_region
          %666 = vsyncadd [#allocation12], 0
          %s667 = sshll.u32 %s13, 4
          %s668 = int_to_ptr.hbm [resolvable:$true] %s667
          %s669 = sshll.u32 [#allocation13], 4
          %s670 = int_to_ptr.vmem [resolvable:$true] %s669
          %675 = dma.hbm_to_vmem [thread:$0]  %s668, 256, %s670, [#allocation12], 64, 64, 4
        $region56: #{tpu_custom_call.1} parent=11 // pred_fallthru
          _
        // Predicated region
        $region57: #{tpu_custom_call.1} parent=11 // pred_check
          %p676 = pneg %p368
        $region58: #{tpu_custom_call.1} parent=11 // pred_check_branch
          %678 = sbr.rel (%p676) target = $region60
        $region59: #{tpu_custom_call.1} parent=11 // pred_region
          _
        $region60: #{tpu_custom_call.1} parent=11 // pred_fallthru
          _
        // Predicated region
        $region61: #{tpu_custom_call.1} parent=11 // pred_check
          %p679 = pneg %p389
        $region62: #{tpu_custom_call.1} parent=11 // pred_check_branch
          %681 = sbr.rel (%p679) target = $region64
        $region63: #{tpu_custom_call.1} parent=11 // pred_region
          _
        $region64: #{tpu_custom_call.1} parent=11 // pred_fallthru
          _
        // Predicated region
        $region65: #{tpu_custom_call.1} parent=11 // pred_check
          %p682 = pneg %p410
        $region66: #{tpu_custom_call.1} parent=11 // pred_check_branch
          %684 = sbr.rel (%p682) target = $region68
        $region67: #{tpu_custom_call.1} parent=11 // pred_region
          _
        $region68: #{tpu_custom_call.1} parent=11 // pred_fallthru
          _
        // Predicated region
        $region69: #{tpu_custom_call.1} parent=11 // pred_check
          %p685 = pneg %p431
        $region70: #{tpu_custom_call.1} parent=11 // pred_check_branch
          %687 = sbr.rel (%p685) target = $region72
        $region71: #{tpu_custom_call.1} parent=11 // pred_region
          _
        $region72: #{tpu_custom_call.1} parent=11 // pred_fallthru
          _
        // Predicated region
        $region73: #{tpu_custom_call.1} parent=11 // pred_check
          %p688 = pneg %p452
        $region74: #{tpu_custom_call.1} parent=11 // pred_check_branch
          %690 = sbr.rel (%p688) target = $region76
        $region75: #{tpu_custom_call.1} parent=11 // pred_region
          _
        $region76: #{tpu_custom_call.1} parent=11 // pred_fallthru
          _
        // Predicated region
        $region77: #{tpu_custom_call.1} parent=11 // pred_check
          %p691 = pneg %p473
        $region78: #{tpu_custom_call.1} parent=11 // pred_check_branch
          %693 = sbr.rel (%p691) target = $region80
        $region79: #{tpu_custom_call.1} parent=11 // pred_region
          _
        $region80: #{tpu_custom_call.1} parent=11 // pred_fallthru
          _
        // Predicated region
        $region81: #{tpu_custom_call.1} parent=11 // pred_check
          %p694 = pneg %p494
        $region82: #{tpu_custom_call.1} parent=11 // pred_check_branch
          %696 = sbr.rel (%p694) target = $region84
        $region83: #{tpu_custom_call.1} parent=11 // pred_region
          _
        $region84: #{tpu_custom_call.1} parent=11 // pred_fallthru
          _
        // Predicated region
        $region85: #{tpu_custom_call.1} parent=11 // pred_check
          %p697 = pneg %p515
        $region86: #{tpu_custom_call.1} parent=11 // pred_check_branch
          %699 = sbr.rel (%p697) target = $region88
        $region87: #{tpu_custom_call.1} parent=11 // pred_region
          _
        $region88: #{tpu_custom_call.1} parent=11 // pred_fallthru
          _
        // Predicated region
        $region89: #{tpu_custom_call.1} parent=11 // pred_check
          %p700 = pneg %p536
        $region90: #{tpu_custom_call.1} parent=11 // pred_check_branch
          %702 = sbr.rel (%p700) target = $region92
        $region91: #{tpu_custom_call.1} parent=11 // pred_region
          _
        $region92: #{tpu_custom_call.1} parent=11 // pred_fallthru
          _
      $region12: #{tpu_custom_call.1} parent=5 // pred_fallthru
        _
      %p703 = scmp.lt.s32.totalorder %s38, 2
      // Predicated region
      $region93: #{tpu_custom_call.1} parent=5 // pred_check
        %p704 = pneg %p703
      $region94: #{tpu_custom_call.1} parent=5 // pred_check_branch
        %706 = sbr.rel (%p704) target = $region96
      $region95: #{tpu_custom_call.1} parent=5 // pred_region
        // Predicated region
        $region97: #{tpu_custom_call.1} parent=95 // pred_check
          %p707 = pneg %p58
        $region98: #{tpu_custom_call.1} parent=95 // pred_check_branch
          %709 = sbr.rel (%p707) target = $region100
        $region99: #{tpu_custom_call.1} parent=95 // pred_region
          %p710 = scmp.lt.s32.totalorder %s38, 1
          %s711 = scalar_select %p710, %s38, 1
          %s712 = smul.addr %s711, 8
          %s713 = scalar_lea.vmem %s0, %s712
        $region100: #{tpu_custom_call.1} parent=95 // pred_fallthru
          _
        // Predicated region
        $region101: #{tpu_custom_call.1} parent=95 // pred_check
          %p714 = pneg %p84
        $region102: #{tpu_custom_call.1} parent=95 // pred_check_branch
          %716 = sbr.rel (%p714) target = $region104
        $region103: #{tpu_custom_call.1} parent=95 // pred_region
          %s717 = smul.u32 2, %s38
          %p718 = scmp.lt.s32.totalorder %s717, 3
          %s719 = scalar_select %p718, %s717, 3
          %s720 = smul.addr %s719, 8
          %s721 = scalar_lea.vmem %s1, %s720
          %s722 = smul.u32 2, %s38
        $region104: #{tpu_custom_call.1} parent=95 // pred_fallthru
          _
        // Predicated region
        $region105: #{tpu_custom_call.1} parent=95 // pred_check
          %p723 = pneg %p110
        $region106: #{tpu_custom_call.1} parent=95 // pred_check_branch
          %725 = sbr.rel (%p723) target = $region108
        $region107: #{tpu_custom_call.1} parent=95 // pred_region
          %s726 = sand.u32 %s100, 1
          %s727 = scalar_lea.sflag [#allocation3], %s726
          %s728 = sand.u32 %s100, 1
          %s729 = scalar_lea.vmem [#allocation2], %s728
          %731 = vsyncadd %s727, 0
          %s732 = scalar_lea.hbm %s2, %s38
          %s734 = sshll.u32 %s732, 4
          %s735 = int_to_ptr.hbm [resolvable:$true] %s734
          %s736 = sshll.u32 %s729, 4
          %s737 = int_to_ptr.vmem [resolvable:$true] %s736
          %739 = dma.hbm_to_vmem [thread:$0]  %s735, 16, %s737, %s727
        $region108: #{tpu_custom_call.1} parent=95 // pred_fallthru
          _
      $region96: #{tpu_custom_call.1} parent=5 // pred_fallthru
        _
      %p740 = scmp.le.s32.totalorder 1, %s38
      %p741 = scmp.lt.s32.totalorder %s38, 3
      %p742 = pnand %p740, %p741
      %p743 = pneg %p742
      // Predicated region
      $region109: #{tpu_custom_call.1} parent=5 // pred_check
        _
      $region110: #{tpu_custom_call.1} parent=5 // pred_check_branch
        %745 = sbr.rel (%p742) target = $region112
      $region111: #{tpu_custom_call.1} parent=5 // pred_region
        %s746 = ssub.s32 %s38, 1
        %s747 = sand.u32 %s103, 1
        %s748 = scalar_lea.sflag [#allocation3], %s747
        %s749 = sand.u32 %s103, 1
        %s750 = scalar_lea.vmem [#allocation2], %s749
        // Predicated region
        $region113: #{tpu_custom_call.1} parent=111 // pred_check
          %p751 = pneg %p116
        $region114: #{tpu_custom_call.1} parent=111 // pred_check_branch
          %753 = sbr.rel (%p751) target = $region116
        $region115: #{tpu_custom_call.1} parent=111 // pred_region
          %755 = dma.done %s748, 16
        $region116: #{tpu_custom_call.1} parent=111 // pred_fallthru
          _
        // Predicated region
        $region117: #{tpu_custom_call.1} parent=111 // pred_check
          %p756 = pneg %p137
        $region118: #{tpu_custom_call.1} parent=111 // pred_check_branch
          %758 = sbr.rel (%p756) target = $region120
        $region119: #{tpu_custom_call.1} parent=111 // pred_region
          %760 = dma.done [#allocation6], 256
        $region120: #{tpu_custom_call.1} parent=111 // pred_fallthru
          _
        // Predicated region
        $region121: #{tpu_custom_call.1} parent=111 // pred_check
          %p761 = pneg %p179
        $region122: #{tpu_custom_call.1} parent=111 // pred_check_branch
          %763 = sbr.rel (%p761) target = $region124
        $region123: #{tpu_custom_call.1} parent=111 // pred_region
          %765 = dma.done [#allocation6], 256
        $region124: #{tpu_custom_call.1} parent=111 // pred_fallthru
          _
        // Predicated region
        $region125: #{tpu_custom_call.1} parent=111 // pred_check
          %p766 = pneg %p221
        $region126: #{tpu_custom_call.1} parent=111 // pred_check_branch
          %768 = sbr.rel (%p766) target = $region128
        $region127: #{tpu_custom_call.1} parent=111 // pred_region
          %770 = dma.done [#allocation9], 256
        $region128: #{tpu_custom_call.1} parent=111 // pred_fallthru
          _
        // Predicated region
        $region129: #{tpu_custom_call.1} parent=111 // pred_check
          %p771 = pneg %p263
        $region130: #{tpu_custom_call.1} parent=111 // pred_check_branch
          %773 = sbr.rel (%p771) target = $region132
        $region131: #{tpu_custom_call.1} parent=111 // pred_region
          %775 = dma.done [#allocation9], 256
        $region132: #{tpu_custom_call.1} parent=111 // pred_fallthru
          _
        // Predicated region
        $region133: #{tpu_custom_call.1} parent=111 // pred_check
          %p776 = pneg %p305
        $region134: #{tpu_custom_call.1} parent=111 // pred_check_branch
          %778 = sbr.rel (%p776) target = $region136
        $region135: #{tpu_custom_call.1} parent=111 // pred_region
          %780 = dma.done [#allocation12], 256
        $region136: #{tpu_custom_call.1} parent=111 // pred_fallthru
          _
        // Predicated region
        $region137: #{tpu_custom_call.1} parent=111 // pred_check
          %p781 = pneg %p347
        $region138: #{tpu_custom_call.1} parent=111 // pred_check_branch
          %783 = sbr.rel (%p781) target = $region140
        $region139: #{tpu_custom_call.1} parent=111 // pred_region
          %785 = dma.done [#allocation12], 256
        $region140: #{tpu_custom_call.1} parent=111 // pred_fallthru
          _
        %p786 = scmp.lt.s32.totalorder %s43, 1
        %s787 = scalar_select %p786, %s43, 1
        %s788 = smul.addr %s787, 8
        %s789 = scalar_lea.vmem %s0, %s788
        %p790 = pneg %p64
        %p791 = pneg %p61
        %s792 = smul.u32 2, %s43
        %p793 = scmp.lt.s32.totalorder %s792, 3
        %s794 = scalar_select %p793, %s792, 3
        %s795 = smul.addr %s794, 8
        %s796 = scalar_lea.vmem %s1, %s795
        %p797 = pneg %p90
        %p798 = pneg %p87
        %s799 = sand.u32 %s103, 1
        %s800 = scalar_lea.sflag [#allocation3], %s799
        %s801 = sand.u32 %s103, 1
        %s802 = scalar_lea.vmem [#allocation2], %s801
        %p803 = pneg %p116
        %p804 = pneg %p113
        %p805 = pneg %p137
        %p806 = pneg %p134
        %p807 = pneg %p158
        %p808 = pneg %p155
        %p809 = pneg %p179
        %p810 = pneg %p176
        %p811 = pneg %p200
        %p812 = pneg %p197
        %p813 = pneg %p221
        %p814 = pneg %p218
        %p815 = pneg %p242
        %p816 = pneg %p239
        %p817 = pneg %p263
        %p818 = pneg %p260
        %p819 = pneg %p284
        %p820 = pneg %p281
        %p821 = pneg %p305
        %p822 = pneg %p302
        %p823 = pneg %p326
        %p824 = pneg %p323
        %p825 = pneg %p347
        %p826 = pneg %p344
        %p827 = pneg %p368
        %p828 = pneg %p365
        %p829 = pneg %p389
        %p830 = pneg %p386
        %p831 = pneg %p410
        %p832 = pneg %p407
        %p833 = pneg %p431
        %p834 = pneg %p428
        %p835 = pneg %p452
        %p836 = pneg %p449
        %p837 = pneg %p473
        %p838 = pneg %p470
        %p839 = pneg %p494
        %p840 = pneg %p491
        %p841 = pneg %p515
        %p842 = pneg %p512
        %p843 = pneg %p536
        %p844 = pneg %p533
        %p845 = pneg %p562
        %p846 = pneg %p559
        %s847 = sand.u32 %s549, 1
        %s848 = scalar_lea.sflag [#allocation4], %s847
        %s849 = sand.u32 %s549, 1
        %s850 = smul.addr %s849, 8
        %s851 = scalar_lea.vmem [#allocation14], %s850
        %p852 = scmp.lt.s32.totalorder %s43, 1
        %s853 = scalar_select %p852, %s43, 1
        %s854 = smul.addr %s853, 8
        %s855 = scalar_lea.vmem %s0, %s854
        %s856 = smul.u32 2, %s43
        %p857 = scmp.lt.s32.totalorder %s856, 3
        %s858 = scalar_select %p857, %s856, 3
        %s859 = smul.addr %s858, 8
        %s860 = scalar_lea.vmem %s1, %s859
        %s861 = smul.u32 2, %s43
        %v863 = vld [vmem:[%s855] sm:$0xff]
        %v864 = vld [vmem:[%s860] sm:$0xff]
        %v865 = vld [vmem:[%s860 + $0x8] sm:$0xff]
        %v866 = vld [vmem:[%s750] sm:$0x1]
        %v867 = vpack.c.bf16 %v863, %v863
        %v868 = vld [vmem:[#allocation5] sm:$0xf]
        %v869 = vld [vmem:[#allocation5 + $0x4] sm:$0xf]
        %v870 = vld [vmem:[#allocation5 + $0x8] sm:$0xf]
        %v871 = vld [vmem:[#allocation5 + $0xc] sm:$0xf]
        %v872 = vld [vmem:[%s4] sm:$0x1]
        %v874 = vperm.slane %v872, 0
        %v880 = vunpack.c.l.b16 %v868
        %v881 = vunpack.c.l.b16 %v869
        %v882 = vunpack.c.l.b16 %v870
        %v883 = vunpack.c.l.b16 %v871
        %v884 = vpack.c.b16 %v881, %v880
        %v885 = vpack.c.b16 %v883, %v882
        %vm888 = vcmask 261120
        %v890 = vsel %vm888, %v867, 0
        %892 = vmatpush.bf16.msra.mxu0 0
        %893 = vmatpush.bf16.msra.mxu0 0
        %894 = vmatpush.bf16.msra.mxu0 0
        %895 = vmatpush.bf16.msra.mxu0 0
        %896 = vmatpush.bf16.msra.mxu0 0
        %897 = vmatpush.bf16.msra.mxu0 0
        %898 = vmatpush.bf16.msra.mxu0 %v885
        %899 = vmatpush.bf16.msra.mxu0 %v884
        %900 = vmatmul.bf16.gmra.mxu0 %v890
        %v901 = vpop.f32.mrf.mxu0
        %v902 = vadd.f32 %v874, %v901
        %v903 = vpop.f32.mrf.mxu0
        %904 = vdwg.mxu0
        %905 = vxpose.xlu0.b32.start [1/16] %v902, 128
        %906 = vxpose.xlu0.b32.cont [2/16] 0.0, 128
        %907 = vxpose.xlu0.b32.cont [3/16] 0.0, 128
        %908 = vxpose.xlu0.b32.cont [4/16] 0.0, 128
        %909 = vxpose.xlu0.b32.cont [5/16] 0.0, 128
        %910 = vxpose.xlu0.b32.cont [6/16] 0.0, 128
        %911 = vxpose.xlu0.b32.cont [7/16] 0.0, 128
        %912 = vxpose.xlu0.b32.cont [8/16] 0.0, 128
        %913 = vxpose.xlu0.b32.cont [9/16] 0.0, 128
        %914 = vxpose.xlu0.b32.cont [10/16] 0.0, 128
        %915 = vxpose.xlu0.b32.cont [11/16] 0.0, 128
        %916 = vxpose.xlu0.b32.cont [12/16] 0.0, 128
        %917 = vxpose.xlu0.b32.cont [13/16] 0.0, 128
        %918 = vxpose.xlu0.b32.cont [14/16] 0.0, 128
        %919 = vxpose.xlu0.b32.cont [15/16] 0.0, 128
        %920 = vxpose.xlu0.b32.end [16/16] 0.0, 128
        %v921 = vpop.trf.xlu0
        %v922 = vpop.trf.xlu0
        %v923 = vpop.trf.xlu0
        %v924 = vpop.trf.xlu0
        %v925 = vpop.trf.xlu0
        %v926 = vpop.trf.xlu0
        %v927 = vpop.trf.xlu0
        %v928 = vpop.trf.xlu0
        %v929 = vpop.trf.xlu0
        %v930 = vpop.trf.xlu0
        %v931 = vpop.trf.xlu0
        %v932 = vpop.trf.xlu0
        %v933 = vpop.trf.xlu0
        %v934 = vpop.trf.xlu0
        %v935 = vpop.trf.xlu0
        %v936 = vpop.trf.xlu0
        %937 = vxpose.xlu0.b32.start [1/16] %v921, 128
        %938 = vxpose.xlu0.b32.cont [2/16] 0.0, 128
        %939 = vxpose.xlu0.b32.cont [3/16] 0.0, 128
        %940 = vxpose.xlu0.b32.cont [4/16] 0.0, 128
        %941 = vxpose.xlu0.b32.cont [5/16] 0.0, 128
        %942 = vxpose.xlu0.b32.cont [6/16] 0.0, 128
        %943 = vxpose.xlu0.b32.cont [7/16] 0.0, 128
        %944 = vxpose.xlu0.b32.cont [8/16] 0.0, 128
        %945 = vxpose.xlu0.b32.cont [9/16] 0.0, 128
        %946 = vxpose.xlu0.b32.cont [10/16] 0.0, 128
        %947 = vxpose.xlu0.b32.cont [11/16] 0.0, 128
        %948 = vxpose.xlu0.b32.cont [12/16] 0.0, 128
        %949 = vxpose.xlu0.b32.cont [13/16] 0.0, 128
        %950 = vxpose.xlu0.b32.cont [14/16] 0.0, 128
        %951 = vxpose.xlu0.b32.cont [15/16] 0.0, 128
        %952 = vxpose.xlu0.b32.end [16/16] 0.0, 128
        %v953 = vpop.trf.xlu0
        %v954 = vpop.trf.xlu0
        %v955 = vpop.trf.xlu0
        %v956 = vpop.trf.xlu0
        %v957 = vpop.trf.xlu0
        %v958 = vpop.trf.xlu0
        %v959 = vpop.trf.xlu0
        %v960 = vpop.trf.xlu0
        %v961 = vpop.trf.xlu0
        %v962 = vpop.trf.xlu0
        %v963 = vpop.trf.xlu0
        %v964 = vpop.trf.xlu0
        %v965 = vpop.trf.xlu0
        %v966 = vpop.trf.xlu0
        %v967 = vpop.trf.xlu0
        %v968 = vpop.trf.xlu0
        %969 = vxpose.xlu0.b32.start [1/16] %v922, 128
        %970 = vxpose.xlu0.b32.cont [2/16] 0.0, 128
        %971 = vxpose.xlu0.b32.cont [3/16] 0.0, 128
        %972 = vxpose.xlu0.b32.cont [4/16] 0.0, 128
        %973 = vxpose.xlu0.b32.cont [5/16] 0.0, 128
        %974 = vxpose.xlu0.b32.cont [6/16] 0.0, 128
        %975 = vxpose.xlu0.b32.cont [7/16] 0.0, 128
        %976 = vxpose.xlu0.b32.cont [8/16] 0.0, 128
        %977 = vxpose.xlu0.b32.cont [9/16] 0.0, 128
        %978 = vxpose.xlu0.b32.cont [10/16] 0.0, 128
        %979 = vxpose.xlu0.b32.cont [11/16] 0.0, 128
        %980 = vxpose.xlu0.b32.cont [12/16] 0.0, 128
        %981 = vxpose.xlu0.b32.cont [13/16] 0.0, 128
        %982 = vxpose.xlu0.b32.cont [14/16] 0.0, 128
        %983 = vxpose.xlu0.b32.cont [15/16] 0.0, 128
        %984 = vxpose.xlu0.b32.end [16/16] 0.0, 128
        %v985 = vpop.trf.xlu0
        %v986 = vpop.trf.xlu0
        %v987 = vpop.trf.xlu0
        %v988 = vpop.trf.xlu0
        %v989 = vpop.trf.xlu0
        %v990 = vpop.trf.xlu0
        %v991 = vpop.trf.xlu0
        %v992 = vpop.trf.xlu0
        %v993 = vpop.trf.xlu0
        %v994 = vpop.trf.xlu0
        %v995 = vpop.trf.xlu0
        %v996 = vpop.trf.xlu0
        %v997 = vpop.trf.xlu0
        %v998 = vpop.trf.xlu0
        %v999 = vpop.trf.xlu0
        %v1000 = vpop.trf.xlu0
        %1001 = vxpose.xlu0.b32.start [1/16] %v923, 128
        %1002 = vxpose.xlu0.b32.cont [2/16] 0.0, 128
        %1003 = vxpose.xlu0.b32.cont [3/16] 0.0, 128
        %1004 = vxpose.xlu0.b32.cont [4/16] 0.0, 128
        %1005 = vxpose.xlu0.b32.cont [5/16] 0.0, 128
        %1006 = vxpose.xlu0.b32.cont [6/16] 0.0, 128
        %1007 = vxpose.xlu0.b32.cont [7/16] 0.0, 128
        %1008 = vxpose.xlu0.b32.cont [8/16] 0.0, 128
        %1009 = vxpose.xlu0.b32.cont [9/16] 0.0, 128
        %1010 = vxpose.xlu0.b32.cont [10/16] 0.0, 128
        %1011 = vxpose.xlu0.b32.cont [11/16] 0.0, 128
        %1012 = vxpose.xlu0.b32.cont [12/16] 0.0, 128
        %1013 = vxpose.xlu0.b32.cont [13/16] 0.0, 128
        %1014 = vxpose.xlu0.b32.cont [14/16] 0.0, 128
        %1015 = vxpose.xlu0.b32.cont [15/16] 0.0, 128
        %1016 = vxpose.xlu0.b32.end [16/16] 0.0, 128
        %v1017 = vpop.trf.xlu0
        %v1018 = vpop.trf.xlu0
        %v1019 = vpop.trf.xlu0
        %v1020 = vpop.trf.xlu0
        %v1021 = vpop.trf.xlu0
        %v1022 = vpop.trf.xlu0
        %v1023 = vpop.trf.xlu0
        %v1024 = vpop.trf.xlu0
        %v1025 = vpop.trf.xlu0
        %v1026 = vpop.trf.xlu0
        %v1027 = vpop.trf.xlu0
        %v1028 = vpop.trf.xlu0
        %v1029 = vpop.trf.xlu0
        %v1030 = vpop.trf.xlu0
        %v1031 = vpop.trf.xlu0
        %v1032 = vpop.trf.xlu0
        %1033 = vxpose.xlu0.b32.start [1/16] %v924, 128
        %1034 = vxpose.xlu0.b32.cont [2/16] 0.0, 128
        %1035 = vxpose.xlu0.b32.cont [3/16] 0.0, 128
        %1036 = vxpose.xlu0.b32.cont [4/16] 0.0, 128
        %1037 = vxpose.xlu0.b32.cont [5/16] 0.0, 128
        %1038 = vxpose.xlu0.b32.cont [6/16] 0.0, 128
        %1039 = vxpose.xlu0.b32.cont [7/16] 0.0, 128
        %1040 = vxpose.xlu0.b32.cont [8/16] 0.0, 128
        %1041 = vxpose.xlu0.b32.cont [9/16] 0.0, 128
        %1042 = vxpose.xlu0.b32.cont [10/16] 0.0, 128
        %1043 = vxpose.xlu0.b32.cont [11/16] 0.0, 128
        %1044 = vxpose.xlu0.b32.cont [12/16] 0.0, 128
        %1045 = vxpose.xlu0.b32.cont [13/16] 0.0, 128
        %1046 = vxpose.xlu0.b32.cont [14/16] 0.0, 128
        %1047 = vxpose.xlu0.b32.cont [15/16] 0.0, 128
        %1048 = vxpose.xlu0.b32.end [16/16] 0.0, 128
        %v1049 = vpop.trf.xlu0
        %v1050 = vpop.trf.xlu0
        %v1051 = vpop.trf.xlu0
        %v1052 = vpop.trf.xlu0
        %v1053 = vpop.trf.xlu0
        %v1054 = vpop.trf.xlu0
        %v1055 = vpop.trf.xlu0
        %v1056 = vpop.trf.xlu0
        %v1057 = vpop.trf.xlu0
        %v1058 = vpop.trf.xlu0
        %v1059 = vpop.trf.xlu0
        %v1060 = vpop.trf.xlu0
        %v1061 = vpop.trf.xlu0
        %v1062 = vpop.trf.xlu0
        %v1063 = vpop.trf.xlu0
        %v1064 = vpop.trf.xlu0
        %v1065 = vpack.c.bf16 %v953, %v953
        %v1066 = vpack.c.bf16 %v985, %v985
        %v1067 = vpack.c.bf16 %v1017, %v1017
        %v1068 = vpack.c.bf16 %v1049, %v1049
        %v1069 = vpack.c.bf16 %v925, %v925
        %v1070 = vpack.c.bf16 %v926, %v926
        %v1071 = vpack.c.bf16 %v927, %v927
        %v1072 = vpack.c.bf16 %v928, %v928
        %v1073 = vpack.c.bf16 %v929, %v929
        %v1074 = vpack.c.bf16 %v930, %v930
        %v1075 = vpack.c.bf16 %v931, %v931
        %v1076 = vpack.c.bf16 %v932, %v932
        %v1077 = vld [vmem:[#allocation7] sm:$0xf]
        %v1078 = vld [vmem:[#allocation7 + $0x4] sm:$0xf]
        %v1079 = vld [vmem:[#allocation7 + $0x8] sm:$0xf]
        %v1080 = vld [vmem:[#allocation7 + $0xc] sm:$0xf]
        %v1081 = vld [vmem:[%s6] sm:$0x1]
        %vm1082 = vcmask 64512
        %v1084 = vsel %vm1082, %v1065, 0
        %vm1086 = vcmask 1043456
        %v1088 = vsel %vm1086, %v1069, 0
        %1090 = vmatpush.bf16.msra.mxu0 0
        %1091 = vmatpush.bf16.msra.mxu0 0
        %1092 = vmatpush.bf16.msra.mxu0 0
        %1093 = vmatpush.bf16.msra.mxu0 0
        %1094 = vmatpush.bf16.msra.mxu0 0
        %1095 = vmatpush.bf16.msra.mxu0 0
        %1096 = vmatpush.bf16.msra.mxu0 0
        %1097 = vmatpush.bf16.msra.mxu0 %v1088
        %1098 = vmatmul.bf16.gmra.mxu0 %v1084
        %v1099 = vpop.f32.mrf.mxu0
        %v1100 = vadd.f32 0.0, %v1099
        %v1101 = vpop.f32.mrf.mxu0
        %1102 = vdwg.mxu0
        %v1104 = vsel %vm1082, %v1066, 0
        %v1107 = vsel %vm1086, %v1070, 0
        %1109 = vmatpush.bf16.msra.mxu0 0
        %1110 = vmatpush.bf16.msra.mxu0 0
        %1111 = vmatpush.bf16.msra.mxu0 0
        %1112 = vmatpush.bf16.msra.mxu0 0
        %1113 = vmatpush.bf16.msra.mxu0 0
        %1114 = vmatpush.bf16.msra.mxu0 0
        %1115 = vmatpush.bf16.msra.mxu0 0
        %1116 = vmatpush.bf16.msra.mxu0 %v1107
        %1117 = vmatmul.bf16.gmra.mxu0 %v1104
        %v1118 = vpop.f32.mrf.mxu0
        %v1119 = vadd.f32 0.0, %v1118
        %v1120 = vpop.f32.mrf.mxu0
        %1121 = vdwg.mxu0
        %v1123 = vsel %vm1082, %v1067, 0
        %v1126 = vsel %vm1086, %v1071, 0
        %1128 = vmatpush.bf16.msra.mxu0 0
        %1129 = vmatpush.bf16.msra.mxu0 0
        %1130 = vmatpush.bf16.msra.mxu0 0
        %1131 = vmatpush.bf16.msra.mxu0 0
        %1132 = vmatpush.bf16.msra.mxu0 0
        %1133 = vmatpush.bf16.msra.mxu0 0
        %1134 = vmatpush.bf16.msra.mxu0 0
        %1135 = vmatpush.bf16.msra.mxu0 %v1126
        %1136 = vmatmul.bf16.gmra.mxu0 %v1123
        %v1137 = vpop.f32.mrf.mxu0
        %v1138 = vadd.f32 0.0, %v1137
        %v1139 = vpop.f32.mrf.mxu0
        %1140 = vdwg.mxu0
        %v1142 = vsel %vm1082, %v1068, 0
        %v1145 = vsel %vm1086, %v1072, 0
        %1147 = vmatpush.bf16.msra.mxu0 0
        %1148 = vmatpush.bf16.msra.mxu0 0
        %1149 = vmatpush.bf16.msra.mxu0 0
        %1150 = vmatpush.bf16.msra.mxu0 0
        %1151 = vmatpush.bf16.msra.mxu0 0
        %1152 = vmatpush.bf16.msra.mxu0 0
        %1153 = vmatpush.bf16.msra.mxu0 0
        %1154 = vmatpush.bf16.msra.mxu0 %v1145
        %1155 = vmatmul.bf16.gmra.mxu0 %v1142
        %v1156 = vpop.f32.mrf.mxu0
        %v1157 = vadd.f32 0.0, %v1156
        %v1158 = vpop.f32.mrf.mxu0
        %1159 = vdwg.mxu0
        %v1160 = vmul.f32 %v1100, 0.35355338
        %v1161 = vmul.f32 %v1119, 0.35355338
        %v1162 = vmul.f32 %v1138, 0.35355338
        %v1163 = vmul.f32 %v1157, 0.35355338
        %v1165 = vperm.slane %v866, 0
        %v1167 = vadd.f32 %v1160, %v1165
        %v1168 = vadd.f32 %v1161, %v1165
        %v1169 = vadd.f32 %v1162, %v1165
        %v1170 = vadd.f32 %v1163, %v1165
        %v1171 = vsel %vm1082, %v1167, -inf
        %1172 = vmax.xlane.f32.xlu0 %v1171
        %v1173 = vpop.xlane.xlu0 %1172
        %v1174 = vsel %vm1082, %v1168, -inf
        %1175 = vmax.xlane.f32.xlu0 %v1174
        %v1176 = vpop.xlane.xlu0 %1175
        %v1177 = vsel %vm1082, %v1169, -inf
        %1178 = vmax.xlane.f32.xlu0 %v1177
        %v1179 = vpop.xlane.xlu0 %1178
        %v1180 = vsel %vm1082, %v1170, -inf
        %1181 = vmax.xlane.f32.xlu0 %v1180
        %v1182 = vpop.xlane.xlu0 %1181
        %v1183 = vsub.f32 %v1167, %v1173
        %v1184 = vsub.f32 %v1168, %v1176
        %v1185 = vsub.f32 %v1169, %v1179
        %v1186 = vsub.f32 %v1170, %v1182
        %v1187 = vmul.f32 %v1183, 1.442695
        %v1188 = vpow.pop %v1187
        %v1189 = vmul.f32 %v1184, 1.442695
        %v1190 = vpow.pop %v1189
        %v1191 = vmul.f32 %v1185, 1.442695
        %v1192 = vpow.pop %v1191
        %v1193 = vmul.f32 %v1186, 1.442695
        %v1194 = vpow.pop %v1193
        %v1195 = vsel %vm1082, %v1188, 0.0
        %1196 = vadd.xlane.f32.xlu0 %v1195
        %v1197 = vpop.xlane.xlu0 %1196
        %v1198 = vsel %vm1082, %v1190, 0.0
        %1199 = vadd.xlane.f32.xlu0 %v1198
        %v1200 = vpop.xlane.xlu0 %1199
        %v1201 = vsel %vm1082, %v1192, 0.0
        %1202 = vadd.xlane.f32.xlu0 %v1201
        %v1203 = vpop.xlane.xlu0 %1202
        %v1204 = vsel %vm1082, %v1194, 0.0
        %1205 = vadd.xlane.f32.xlu0 %v1204
        %v1206 = vpop.xlane.xlu0 %1205
        %v1207 = vrcp.pop %v1197
        %v1208 = vrcp.pop %v1200
        %v1209 = vrcp.pop %v1203
        %v1210 = vrcp.pop %v1206
        %v1211 = vmul.f32 %v1188, %v1207
        %v1212 = vmul.f32 %v1190, %v1208
        %v1213 = vmul.f32 %v1192, %v1209
        %v1214 = vmul.f32 %v1194, %v1210
        %v1215 = vpack.c.bf16 %v1211, %v1211
        %v1216 = vpack.c.bf16 %v1212, %v1212
        %v1217 = vpack.c.bf16 %v1213, %v1213
        %v1218 = vpack.c.bf16 %v1214, %v1214
        %v1220 = vsel %vm1082, %v1215, 0
        %v1223 = vsel %vm1082, %v1073, 0
        %1225 = vmatpush.bf16.xpose.msra.mxu0 0
        %1226 = vmatpush.bf16.xpose.msra.mxu0 0
        %1227 = vmatpush.bf16.xpose.msra.mxu0 0
        %1228 = vmatpush.bf16.xpose.msra.mxu0 0
        %1229 = vmatpush.bf16.xpose.msra.mxu0 0
        %1230 = vmatpush.bf16.xpose.msra.mxu0 0
        %1231 = vmatpush.bf16.xpose.msra.mxu0 0
        %1232 = vmatpush.bf16.xpose.msra.mxu0 %v1223
        %1233 = vmatmul.bf16.gmra.mxu0 %v1220
        %v1234 = vpop.f32.mrf.mxu0
        %v1235 = vadd.f32 0.0, %v1234
        %v1236 = vpop.f32.mrf.mxu0
        %1237 = vdwg.mxu0
        %v1239 = vsel %vm1082, %v1216, 0
        %v1242 = vsel %vm1082, %v1074, 0
        %1244 = vmatpush.bf16.xpose.msra.mxu0 0
        %1245 = vmatpush.bf16.xpose.msra.mxu0 0
        %1246 = vmatpush.bf16.xpose.msra.mxu0 0
        %1247 = vmatpush.bf16.xpose.msra.mxu0 0
        %1248 = vmatpush.bf16.xpose.msra.mxu0 0
        %1249 = vmatpush.bf16.xpose.msra.mxu0 0
        %1250 = vmatpush.bf16.xpose.msra.mxu0 0
        %1251 = vmatpush.bf16.xpose.msra.mxu0 %v1242
        %1252 = vmatmul.bf16.gmra.mxu0 %v1239
        %v1253 = vpop.f32.mrf.mxu0
        %v1254 = vadd.f32 0.0, %v1253
        %v1255 = vpop.f32.mrf.mxu0
        %1256 = vdwg.mxu0
        %v1258 = vsel %vm1082, %v1217, 0
        %v1261 = vsel %vm1082, %v1075, 0
        %1263 = vmatpush.bf16.xpose.msra.mxu0 0
        %1264 = vmatpush.bf16.xpose.msra.mxu0 0
        %1265 = vmatpush.bf16.xpose.msra.mxu0 0
        %1266 = vmatpush.bf16.xpose.msra.mxu0 0
        %1267 = vmatpush.bf16.xpose.msra.mxu0 0
        %1268 = vmatpush.bf16.xpose.msra.mxu0 0
        %1269 = vmatpush.bf16.xpose.msra.mxu0 0
        %1270 = vmatpush.bf16.xpose.msra.mxu0 %v1261
        %1271 = vmatmul.bf16.gmra.mxu0 %v1258
        %v1272 = vpop.f32.mrf.mxu0
        %v1273 = vadd.f32 0.0, %v1272
        %v1274 = vpop.f32.mrf.mxu0
        %1275 = vdwg.mxu0
        %v1277 = vsel %vm1082, %v1218, 0
        %v1280 = vsel %vm1082, %v1076, 0
        %1282 = vmatpush.bf16.xpose.msra.mxu0 0
        %1283 = vmatpush.bf16.xpose.msra.mxu0 0
        %1284 = vmatpush.bf16.xpose.msra.mxu0 0
        %1285 = vmatpush.bf16.xpose.msra.mxu0 0
        %1286 = vmatpush.bf16.xpose.msra.mxu0 0
        %1287 = vmatpush.bf16.xpose.msra.mxu0 0
        %1288 = vmatpush.bf16.xpose.msra.mxu0 0
        %1289 = vmatpush.bf16.xpose.msra.mxu0 %v1280
        %1290 = vmatmul.bf16.gmra.mxu0 %v1277
        %v1291 = vpop.f32.mrf.mxu0
        %v1292 = vadd.f32 0.0, %v1291
        %v1293 = vpop.f32.mrf.mxu0
        %1294 = vdwg.mxu0
        %v1295 = vpack.c.bf16 %v1235, %v1235
        %v1296 = vpack.c.bf16 %v1254, %v1254
        %v1297 = vpack.c.bf16 %v1273, %v1273
        %v1298 = vpack.c.bf16 %v1292, %v1292
        %v1300 = vsel %vm1082, %v1295, 0
        %v1303 = vsel %vm1086, %v1077, 0
        %1305 = vmatpush.bf16.msra.mxu0 0
        %1306 = vmatpush.bf16.msra.mxu0 0
        %1307 = vmatpush.bf16.msra.mxu0 0
        %1308 = vmatpush.bf16.msra.mxu0 0
        %1309 = vmatpush.bf16.msra.mxu0 0
        %1310 = vmatpush.bf16.msra.mxu0 0
        %1311 = vmatpush.bf16.msra.mxu0 0
        %1312 = vmatpush.bf16.msra.mxu0 %v1303
        %1313 = vmatmul.bf16.gmra.mxu0 %v1300
        %v1314 = vpop.f32.mrf.mxu0
        %v1315 = vadd.f32 0.0, %v1314
        %v1316 = vpop.f32.mrf.mxu0
        %1317 = vdwg.mxu0
        %v1319 = vsel %vm1082, %v1296, 0
        %v1322 = vsel %vm1086, %v1078, 0
        %1324 = vmatpush.bf16.msra.mxu0 0
        %1325 = vmatpush.bf16.msra.mxu0 0
        %1326 = vmatpush.bf16.msra.mxu0 0
        %1327 = vmatpush.bf16.msra.mxu0 0
        %1328 = vmatpush.bf16.msra.mxu0 0
        %1329 = vmatpush.bf16.msra.mxu0 0
        %1330 = vmatpush.bf16.msra.mxu0 0
        %1331 = vmatpush.bf16.msra.mxu0 %v1322
        %1332 = vmatmul.bf16.gmra.mxu0 %v1319
        %v1333 = vpop.f32.mrf.mxu0
        %v1334 = vadd.f32 0.0, %v1333
        %v1335 = vpop.f32.mrf.mxu0
        %1336 = vdwg.mxu0
        %v1338 = vsel %vm1082, %v1297, 0
        %v1341 = vsel %vm1086, %v1079, 0
        %1343 = vmatpush.bf16.msra.mxu0 0
        %1344 = vmatpush.bf16.msra.mxu0 0
        %1345 = vmatpush.bf16.msra.mxu0 0
        %1346 = vmatpush.bf16.msra.mxu0 0
        %1347 = vmatpush.bf16.msra.mxu0 0
        %1348 = vmatpush.bf16.msra.mxu0 0
        %1349 = vmatpush.bf16.msra.mxu0 0
        %1350 = vmatpush.bf16.msra.mxu0 %v1341
        %1351 = vmatmul.bf16.gmra.mxu0 %v1338
        %v1352 = vpop.f32.mrf.mxu0
        %v1353 = vadd.f32 0.0, %v1352
        %v1354 = vpop.f32.mrf.mxu0
        %1355 = vdwg.mxu0
        %v1357 = vsel %vm1082, %v1298, 0
        %v1360 = vsel %vm1086, %v1080, 0
        %1362 = vmatpush.bf16.msra.mxu0 0
        %1363 = vmatpush.bf16.msra.mxu0 0
        %1364 = vmatpush.bf16.msra.mxu0 0
        %1365 = vmatpush.bf16.msra.mxu0 0
        %1366 = vmatpush.bf16.msra.mxu0 0
        %1367 = vmatpush.bf16.msra.mxu0 0
        %1368 = vmatpush.bf16.msra.mxu0 0
        %1369 = vmatpush.bf16.msra.mxu0 %v1360
        %1370 = vmatmul.bf16.gmra.mxu0 %v1357
        %v1371 = vpop.f32.mrf.mxu0
        %v1372 = vadd.f32 0.0, %v1371
        %v1373 = vpop.f32.mrf.mxu0
        %1374 = vdwg.mxu0
        %v1375 = vsel %vm888, %v1315, 0.0
        %v1376 = vsel %vm888, %v1334, 0.0
        %v1377 = vadd.f32 %v1375, %v1376
        %v1378 = vsel %vm888, %v1353, 0.0
        %v1379 = vadd.f32 %v1377, %v1378
        %v1380 = vsel %vm888, %v1372, 0.0
        %v1381 = vadd.f32 %v1379, %v1380
        %v1383 = vperm.slane %v1081, 0
        %v1385 = vadd.f32 %v1381, %v1383
        %v1386 = vadd.f32 %v863, %v1385
        %v1387 = vld [vmem:[%s17] sm:$0x1]
        %v1388 = vld [vmem:[%s18] sm:$0x1]
        %v1389 = vsel %vm888, %v1386, 0.0
        %1390 = vadd.xlane.f32.xlu0 %v1389
        %v1391 = vpop.xlane.xlu0 %1390
        %v1392 = vrcp.pop 32.0
        %v1393 = vmul.f32 32.0, %v1392
        %v1394 = vsub.f32 1.0, %v1393
        %v1395 = vmul.f32 %v1392, %v1394
        %v1396 = vadd.f32 %v1392, %v1395
        %vm1397 = vweird.f32 %v1392
        %v1398 = vsel %vm1397, %v1392, %v1396
        %v1399 = vmul.f32 %v1391, %v1398
        %v1400 = vsub.f32 %v1386, %v1399
        %v1401 = vmul.f32 %v1400, %v1400
        %v1402 = vsel %vm888, %v1401, 0.0
        %1403 = vadd.xlane.f32.xlu0 %v1402
        %v1404 = vpop.xlane.xlu0 %1403
        %v1405 = vmul.f32 %v1404, %v1398
        %v1406 = vadd.f32 %v1405, 1e-05
        %v1407 = vrsqrt.pop %v1406
        %v1408 = vmul.f32 %v1407, %v1406
        %v1409 = vmul.f32 %v1408, %v1407
        %v1410 = vmul.f32 0.5, %v1409
        %v1411 = vsub.f32 1.5, %v1410
        %v1412 = vmul.f32 %v1407, %v1411
        %vm1413 = vweird.f32 %v1406
        %vm1414 = vweird.f32 %v1407
        %vm1415 = vmor %vm1413, %vm1414
        %v1416 = vsel %vm1415, %v1407, %v1412
        %v1417 = vmul.f32 %v1400, %v1416
        %v1419 = vperm.slane %v1387, 0
        %v1421 = vmul.f32 %v1417, %v1419
        %v1423 = vperm.slane %v1388, 0
        %v1425 = vadd.f32 %v1421, %v1423
        %v1426 = vpack.c.bf16 %v1425, %v1425
        %v1427 = vld [vmem:[#allocation8] sm:$0xf]
        %v1428 = vld [vmem:[#allocation8 + $0x4] sm:$0xf]
        %v1429 = vld [vmem:[#allocation8 + $0x8] sm:$0xf]
        %v1430 = vld [vmem:[#allocation8 + $0xc] sm:$0xf]
        %v1431 = vld [vmem:[%s8] sm:$0x1]
        %v1433 = vperm.slane %v1431, 0
        %v1439 = vunpack.c.l.b16 %v1427
        %v1440 = vunpack.c.l.b16 %v1428
        %v1441 = vunpack.c.l.b16 %v1429
        %v1442 = vunpack.c.l.b16 %v1430
        %v1443 = vpack.c.b16 %v1440, %v1439
        %v1444 = vpack.c.b16 %v1442, %v1441
        %v1448 = vsel %vm888, %v1426, 0
        %1450 = vmatpush.bf16.msra.mxu0 0
        %1451 = vmatpush.bf16.msra.mxu0 0
        %1452 = vmatpush.bf16.msra.mxu0 0
        %1453 = vmatpush.bf16.msra.mxu0 0
        %1454 = vmatpush.bf16.msra.mxu0 0
        %1455 = vmatpush.bf16.msra.mxu0 0
        %1456 = vmatpush.bf16.msra.mxu0 %v1444
        %1457 = vmatpush.bf16.msra.mxu0 %v1443
        %1458 = vmatmul.bf16.gmra.mxu0 %v1448
        %v1459 = vpop.f32.mrf.mxu0
        %v1460 = vadd.f32 %v1433, %v1459
        %v1461 = vpop.f32.mrf.mxu0
        %1462 = vdwg.mxu0
        %1463 = vxpose.xlu0.b32.start [1/16] %v1460, 128
        %1464 = vxpose.xlu0.b32.cont [2/16] 0.0, 128
        %1465 = vxpose.xlu0.b32.cont [3/16] 0.0, 128
        %1466 = vxpose.xlu0.b32.cont [4/16] 0.0, 128
        %1467 = vxpose.xlu0.b32.cont [5/16] 0.0, 128
        %1468 = vxpose.xlu0.b32.cont [6/16] 0.0, 128
        %1469 = vxpose.xlu0.b32.cont [7/16] 0.0, 128
        %1470 = vxpose.xlu0.b32.cont [8/16] 0.0, 128
        %1471 = vxpose.xlu0.b32.cont [9/16] 0.0, 128
        %1472 = vxpose.xlu0.b32.cont [10/16] 0.0, 128
        %1473 = vxpose.xlu0.b32.cont [11/16] 0.0, 128
        %1474 = vxpose.xlu0.b32.cont [12/16] 0.0, 128
        %1475 = vxpose.xlu0.b32.cont [13/16] 0.0, 128
        %1476 = vxpose.xlu0.b32.cont [14/16] 0.0, 128
        %1477 = vxpose.xlu0.b32.cont [15/16] 0.0, 128
        %1478 = vxpose.xlu0.b32.end [16/16] 0.0, 128
        %v1479 = vpop.trf.xlu0
        %v1480 = vpop.trf.xlu0
        %v1481 = vpop.trf.xlu0
        %v1482 = vpop.trf.xlu0
        %v1483 = vpop.trf.xlu0
        %v1484 = vpop.trf.xlu0
        %v1485 = vpop.trf.xlu0
        %v1486 = vpop.trf.xlu0
        %v1487 = vpop.trf.xlu0
        %v1488 = vpop.trf.xlu0
        %v1489 = vpop.trf.xlu0
        %v1490 = vpop.trf.xlu0
        %v1491 = vpop.trf.xlu0
        %v1492 = vpop.trf.xlu0
        %v1493 = vpop.trf.xlu0
        %v1494 = vpop.trf.xlu0
        %1495 = vxpose.xlu0.b32.start [1/16] %v1479, 128
        %1496 = vxpose.xlu0.b32.cont [2/16] 0.0, 128
        %1497 = vxpose.xlu0.b32.cont [3/16] 0.0, 128
        %1498 = vxpose.xlu0.b32.cont [4/16] 0.0, 128
        %1499 = vxpose.xlu0.b32.cont [5/16] 0.0, 128
        %1500 = vxpose.xlu0.b32.cont [6/16] 0.0, 128
        %1501 = vxpose.xlu0.b32.cont [7/16] 0.0, 128
        %1502 = vxpose.xlu0.b32.cont [8/16] 0.0, 128
        %1503 = vxpose.xlu0.b32.cont [9/16] 0.0, 128
        %1504 = vxpose.xlu0.b32.cont [10/16] 0.0, 128
        %1505 = vxpose.xlu0.b32.cont [11/16] 0.0, 128
        %1506 = vxpose.xlu0.b32.cont [12/16] 0.0, 128
        %1507 = vxpose.xlu0.b32.cont [13/16] 0.0, 128
        %1508 = vxpose.xlu0.b32.cont [14/16] 0.0, 128
        %1509 = vxpose.xlu0.b32.cont [15/16] 0.0, 128
        %1510 = vxpose.xlu0.b32.end [16/16] 0.0, 128
        %v1511 = vpop.trf.xlu0
        %v1512 = vpop.trf.xlu0
        %v1513 = vpop.trf.xlu0
        %v1514 = vpop.trf.xlu0
        %v1515 = vpop.trf.xlu0
        %v1516 = vpop.trf.xlu0
        %v1517 = vpop.trf.xlu0
        %v1518 = vpop.trf.xlu0
        %v1519 = vpop.trf.xlu0
        %v1520 = vpop.trf.xlu0
        %v1521 = vpop.trf.xlu0
        %v1522 = vpop.trf.xlu0
        %v1523 = vpop.trf.xlu0
        %v1524 = vpop.trf.xlu0
        %v1525 = vpop.trf.xlu0
        %v1526 = vpop.trf.xlu0
        %1527 = vxpose.xlu0.b32.start [1/16] %v1480, 128
        %1528 = vxpose.xlu0.b32.cont [2/16] 0.0, 128
        %1529 = vxpose.xlu0.b32.cont [3/16] 0.0, 128
        %1530 = vxpose.xlu0.b32.cont [4/16] 0.0, 128
        %1531 = vxpose.xlu0.b32.cont [5/16] 0.0, 128
        %1532 = vxpose.xlu0.b32.cont [6/16] 0.0, 128
        %1533 = vxpose.xlu0.b32.cont [7/16] 0.0, 128
        %1534 = vxpose.xlu0.b32.cont [8/16] 0.0, 128
        %1535 = vxpose.xlu0.b32.cont [9/16] 0.0, 128
        %1536 = vxpose.xlu0.b32.cont [10/16] 0.0, 128
        %1537 = vxpose.xlu0.b32.cont [11/16] 0.0, 128
        %1538 = vxpose.xlu0.b32.cont [12/16] 0.0, 128
        %1539 = vxpose.xlu0.b32.cont [13/16] 0.0, 128
        %1540 = vxpose.xlu0.b32.cont [14/16] 0.0, 128
        %1541 = vxpose.xlu0.b32.cont [15/16] 0.0, 128
        %1542 = vxpose.xlu0.b32.end [16/16] 0.0, 128
        %v1543 = vpop.trf.xlu0
        %v1544 = vpop.trf.xlu0
        %v1545 = vpop.trf.xlu0
        %v1546 = vpop.trf.xlu0
        %v1547 = vpop.trf.xlu0
        %v1548 = vpop.trf.xlu0
        %v1549 = vpop.trf.xlu0
        %v1550 = vpop.trf.xlu0
        %v1551 = vpop.trf.xlu0
        %v1552 = vpop.trf.xlu0
        %v1553 = vpop.trf.xlu0
        %v1554 = vpop.trf.xlu0
        %v1555 = vpop.trf.xlu0
        %v1556 = vpop.trf.xlu0
        %v1557 = vpop.trf.xlu0
        %v1558 = vpop.trf.xlu0
        %1559 = vxpose.xlu0.b32.start [1/16] %v1481, 128
        %1560 = vxpose.xlu0.b32.cont [2/16] 0.0, 128
        %1561 = vxpose.xlu0.b32.cont [3/16] 0.0, 128
        %1562 = vxpose.xlu0.b32.cont [4/16] 0.0, 128
        %1563 = vxpose.xlu0.b32.cont [5/16] 0.0, 128
        %1564 = vxpose.xlu0.b32.cont [6/16] 0.0, 128
        %1565 = vxpose.xlu0.b32.cont [7/16] 0.0, 128
        %1566 = vxpose.xlu0.b32.cont [8/16] 0.0, 128
        %1567 = vxpose.xlu0.b32.cont [9/16] 0.0, 128
        %1568 = vxpose.xlu0.b32.cont [10/16] 0.0, 128
        %1569 = vxpose.xlu0.b32.cont [11/16] 0.0, 128
        %1570 = vxpose.xlu0.b32.cont [12/16] 0.0, 128
        %1571 = vxpose.xlu0.b32.cont [13/16] 0.0, 128
        %1572 = vxpose.xlu0.b32.cont [14/16] 0.0, 128
        %1573 = vxpose.xlu0.b32.cont [15/16] 0.0, 128
        %1574 = vxpose.xlu0.b32.end [16/16] 0.0, 128
        %v1575 = vpop.trf.xlu0
        %v1576 = vpop.trf.xlu0
        %v1577 = vpop.trf.xlu0
        %v1578 = vpop.trf.xlu0
        %v1579 = vpop.trf.xlu0
        %v1580 = vpop.trf.xlu0
        %v1581 = vpop.trf.xlu0
        %v1582 = vpop.trf.xlu0
        %v1583 = vpop.trf.xlu0
        %v1584 = vpop.trf.xlu0
        %v1585 = vpop.trf.xlu0
        %v1586 = vpop.trf.xlu0
        %v1587 = vpop.trf.xlu0
        %v1588 = vpop.trf.xlu0
        %v1589 = vpop.trf.xlu0
        %v1590 = vpop.trf.xlu0
        %1591 = vxpose.xlu0.b32.start [1/16] %v1482, 128
        %1592 = vxpose.xlu0.b32.cont [2/16] 0.0, 128
        %1593 = vxpose.xlu0.b32.cont [3/16] 0.0, 128
        %1594 = vxpose.xlu0.b32.cont [4/16] 0.0, 128
        %1595 = vxpose.xlu0.b32.cont [5/16] 0.0, 128
        %1596 = vxpose.xlu0.b32.cont [6/16] 0.0, 128
        %1597 = vxpose.xlu0.b32.cont [7/16] 0.0, 128
        %1598 = vxpose.xlu0.b32.cont [8/16] 0.0, 128
        %1599 = vxpose.xlu0.b32.cont [9/16] 0.0, 128
        %1600 = vxpose.xlu0.b32.cont [10/16] 0.0, 128
        %1601 = vxpose.xlu0.b32.cont [11/16] 0.0, 128
        %1602 = vxpose.xlu0.b32.cont [12/16] 0.0, 128
        %1603 = vxpose.xlu0.b32.cont [13/16] 0.0, 128
        %1604 = vxpose.xlu0.b32.cont [14/16] 0.0, 128
        %1605 = vxpose.xlu0.b32.cont [15/16] 0.0, 128
        %1606 = vxpose.xlu0.b32.end [16/16] 0.0, 128
        %v1607 = vpop.trf.xlu0
        %v1608 = vpop.trf.xlu0
        %v1609 = vpop.trf.xlu0
        %v1610 = vpop.trf.xlu0
        %v1611 = vpop.trf.xlu0
        %v1612 = vpop.trf.xlu0
        %v1613 = vpop.trf.xlu0
        %v1614 = vpop.trf.xlu0
        %v1615 = vpop.trf.xlu0
        %v1616 = vpop.trf.xlu0
        %v1617 = vpop.trf.xlu0
        %v1618 = vpop.trf.xlu0
        %v1619 = vpop.trf.xlu0
        %v1620 = vpop.trf.xlu0
        %v1621 = vpop.trf.xlu0
        %v1622 = vpop.trf.xlu0
        %v1623 = vpack.c.bf16 %v1511, %v1511
        %v1624 = vpack.c.bf16 %v1543, %v1543
        %v1625 = vpack.c.bf16 %v1575, %v1575
        %v1626 = vpack.c.bf16 %v1607, %v1607
        %v1627 = vpack.c.bf16 %v865, %v864
        %v1628 = vld [vmem:[#allocation10] sm:$0xf]
        %v1629 = vld [vmem:[#allocation10 + $0x4] sm:$0xf]
        %v1630 = vld [vmem:[#allocation10 + $0x8] sm:$0xf]
        %v1631 = vld [vmem:[#allocation10 + $0xc] sm:$0xf]
        %v1632 = vld [vmem:[%s10] sm:$0x1]
        %v1634 = vperm.slane %v1632, 0
        %v1640 = vunpack.c.l.b16 %v1628
        %v1641 = vunpack.c.l.b16 %v1629
        %v1642 = vunpack.c.l.b16 %v1630
        %v1643 = vunpack.c.l.b16 %v1631
        %v1644 = vpack.c.b16 %v1641, %v1640
        %v1645 = vpack.c.b16 %v1643, %v1642
        %v1649 = vsel %vm888, %v1627, 0
        %1651 = vmatpush.bf16.msra.mxu0 0
        %1652 = vmatpush.bf16.msra.mxu0 0
        %1653 = vmatpush.bf16.msra.mxu0 0
        %1654 = vmatpush.bf16.msra.mxu0 0
        %1655 = vmatpush.bf16.msra.mxu0 0
        %1656 = vmatpush.bf16.msra.mxu0 0
        %1657 = vmatpush.bf16.msra.mxu0 %v1645
        %1658 = vmatpush.bf16.msra.mxu0 %v1644
        %1659 = vmatmul.bf16.gmra.mxu0 %v1649
        %v1660 = vpop.f32.mrf.mxu0
        %v1661 = vadd.f32 %v1634, %v1660
        %v1662 = vpop.f32.mrf.mxu0
        %v1663 = vadd.f32 %v1634, %v1662
        %1664 = vdwg.mxu0
        %1665 = vxpose.xlu0.b32.start [1/16] %v1661, 128
        %1666 = vxpose.xlu0.b32.cont [2/16] %v1663, 128
        %1667 = vxpose.xlu0.b32.cont [3/16] 0.0, 128
        %1668 = vxpose.xlu0.b32.cont [4/16] 0.0, 128
        %1669 = vxpose.xlu0.b32.cont [5/16] 0.0, 128
        %1670 = vxpose.xlu0.b32.cont [6/16] 0.0, 128
        %1671 = vxpose.xlu0.b32.cont [7/16] 0.0, 128
        %1672 = vxpose.xlu0.b32.cont [8/16] 0.0, 128
        %1673 = vxpose.xlu0.b32.cont [9/16] 0.0, 128
        %1674 = vxpose.xlu0.b32.cont [10/16] 0.0, 128
        %1675 = vxpose.xlu0.b32.cont [11/16] 0.0, 128
        %1676 = vxpose.xlu0.b32.cont [12/16] 0.0, 128
        %1677 = vxpose.xlu0.b32.cont [13/16] 0.0, 128
        %1678 = vxpose.xlu0.b32.cont [14/16] 0.0, 128
        %1679 = vxpose.xlu0.b32.cont [15/16] 0.0, 128
        %1680 = vxpose.xlu0.b32.end [16/16] 0.0, 128
        %v1681 = vpop.trf.xlu0
        %v1682 = vpop.trf.xlu0
        %v1683 = vpop.trf.xlu0
        %v1684 = vpop.trf.xlu0
        %v1685 = vpop.trf.xlu0
        %v1686 = vpop.trf.xlu0
        %v1687 = vpop.trf.xlu0
        %v1688 = vpop.trf.xlu0
        %v1689 = vpop.trf.xlu0
        %v1690 = vpop.trf.xlu0
        %v1691 = vpop.trf.xlu0
        %v1692 = vpop.trf.xlu0
        %v1693 = vpop.trf.xlu0
        %v1694 = vpop.trf.xlu0
        %v1695 = vpop.trf.xlu0
        %v1696 = vpop.trf.xlu0
        %v1697 = vpack.c.bf16 %v1681, %v1681
        %v1698 = vpack.c.bf16 %v1682, %v1682
        %v1699 = vpack.c.bf16 %v1683, %v1683
        %v1700 = vpack.c.bf16 %v1684, %v1684
        %v1701 = vpack.c.bf16 %v1685, %v1685
        %v1702 = vpack.c.bf16 %v1686, %v1686
        %v1703 = vpack.c.bf16 %v1687, %v1687
        %v1704 = vpack.c.bf16 %v1688, %v1688
        %v1705 = vld [vmem:[#allocation11] sm:$0xf]
        %v1706 = vld [vmem:[#allocation11 + $0x4] sm:$0xf]
        %v1707 = vld [vmem:[#allocation11 + $0x8] sm:$0xf]
        %v1708 = vld [vmem:[#allocation11 + $0xc] sm:$0xf]
        %v1709 = vld [vmem:[%s12] sm:$0x1]
        %v1711 = vsel %vm1082, %v1623, 0
        %v1714 = vsel %vm1086, %v1697, 0
        %1716 = vmatpush.bf16.msra.mxu0 0
        %1717 = vmatpush.bf16.msra.mxu0 0
        %1718 = vmatpush.bf16.msra.mxu0 0
        %1719 = vmatpush.bf16.msra.mxu0 0
        %1720 = vmatpush.bf16.msra.mxu0 0
        %1721 = vmatpush.bf16.msra.mxu0 0
        %1722 = vmatpush.bf16.msra.mxu0 0
        %1723 = vmatpush.bf16.msra.mxu0 %v1714
        %1724 = vmatmul.bf16.gmra.mxu0 %v1711
        %v1725 = vpop.f32.mrf.mxu0
        %v1726 = vadd.f32 0.0, %v1725
        %v1727 = vpop.f32.mrf.mxu0
        %1728 = vdwg.mxu0
        %v1730 = vsel %vm1082, %v1624, 0
        %v1733 = vsel %vm1086, %v1698, 0
        %1735 = vmatpush.bf16.msra.mxu0 0
        %1736 = vmatpush.bf16.msra.mxu0 0
        %1737 = vmatpush.bf16.msra.mxu0 0
        %1738 = vmatpush.bf16.msra.mxu0 0
        %1739 = vmatpush.bf16.msra.mxu0 0
        %1740 = vmatpush.bf16.msra.mxu0 0
        %1741 = vmatpush.bf16.msra.mxu0 0
        %1742 = vmatpush.bf16.msra.mxu0 %v1733
        %1743 = vmatmul.bf16.gmra.mxu0 %v1730
        %v1744 = vpop.f32.mrf.mxu0
        %v1745 = vadd.f32 0.0, %v1744
        %v1746 = vpop.f32.mrf.mxu0
        %1747 = vdwg.mxu0
        %v1749 = vsel %vm1082, %v1625, 0
        %v1752 = vsel %vm1086, %v1699, 0
        %1754 = vmatpush.bf16.msra.mxu0 0
        %1755 = vmatpush.bf16.msra.mxu0 0
        %1756 = vmatpush.bf16.msra.mxu0 0
        %1757 = vmatpush.bf16.msra.mxu0 0
        %1758 = vmatpush.bf16.msra.mxu0 0
        %1759 = vmatpush.bf16.msra.mxu0 0
        %1760 = vmatpush.bf16.msra.mxu0 0
        %1761 = vmatpush.bf16.msra.mxu0 %v1752
        %1762 = vmatmul.bf16.gmra.mxu0 %v1749
        %v1763 = vpop.f32.mrf.mxu0
        %v1764 = vadd.f32 0.0, %v1763
        %v1765 = vpop.f32.mrf.mxu0
        %1766 = vdwg.mxu0
        %v1768 = vsel %vm1082, %v1626, 0
        %v1771 = vsel %vm1086, %v1700, 0
        %1773 = vmatpush.bf16.msra.mxu0 0
        %1774 = vmatpush.bf16.msra.mxu0 0
        %1775 = vmatpush.bf16.msra.mxu0 0
        %1776 = vmatpush.bf16.msra.mxu0 0
        %1777 = vmatpush.bf16.msra.mxu0 0
        %1778 = vmatpush.bf16.msra.mxu0 0
        %1779 = vmatpush.bf16.msra.mxu0 0
        %1780 = vmatpush.bf16.msra.mxu0 %v1771
        %1781 = vmatmul.bf16.gmra.mxu0 %v1768
        %v1782 = vpop.f32.mrf.mxu0
        %v1783 = vadd.f32 0.0, %v1782
        %v1784 = vpop.f32.mrf.mxu0
        %1785 = vdwg.mxu0
        %v1786 = vmul.f32 %v1726, 0.35355338
        %v1787 = vmul.f32 %v1745, 0.35355338
        %v1788 = vmul.f32 %v1764, 0.35355338
        %v1789 = vmul.f32 %v1783, 0.35355338
        %vm1790 = vcmask 130048
        %v1791 = vsel %vm1790, %v1786, -inf
        %1792 = vmax.xlane.f32.xlu0 %v1791
        %v1793 = vpop.xlane.xlu0 %1792
        %v1794 = vsel %vm1790, %v1787, -inf
        %1795 = vmax.xlane.f32.xlu0 %v1794
        %v1796 = vpop.xlane.xlu0 %1795
        %v1797 = vsel %vm1790, %v1788, -inf
        %1798 = vmax.xlane.f32.xlu0 %v1797
        %v1799 = vpop.xlane.xlu0 %1798
        %v1800 = vsel %vm1790, %v1789, -inf
        %1801 = vmax.xlane.f32.xlu0 %v1800
        %v1802 = vpop.xlane.xlu0 %1801
        %v1803 = vsub.f32 %v1786, %v1793
        %v1804 = vsub.f32 %v1787, %v1796
        %v1805 = vsub.f32 %v1788, %v1799
        %v1806 = vsub.f32 %v1789, %v1802
        %v1807 = vmul.f32 %v1803, 1.442695
        %v1808 = vpow.pop %v1807
        %v1809 = vmul.f32 %v1804, 1.442695
        %v1810 = vpow.pop %v1809
        %v1811 = vmul.f32 %v1805, 1.442695
        %v1812 = vpow.pop %v1811
        %v1813 = vmul.f32 %v1806, 1.442695
        %v1814 = vpow.pop %v1813
        %v1815 = vsel %vm1790, %v1808, 0.0
        %1816 = vadd.xlane.f32.xlu0 %v1815
        %v1817 = vpop.xlane.xlu0 %1816
        %v1818 = vsel %vm1790, %v1810, 0.0
        %1819 = vadd.xlane.f32.xlu0 %v1818
        %v1820 = vpop.xlane.xlu0 %1819
        %v1821 = vsel %vm1790, %v1812, 0.0
        %1822 = vadd.xlane.f32.xlu0 %v1821
        %v1823 = vpop.xlane.xlu0 %1822
        %v1824 = vsel %vm1790, %v1814, 0.0
        %1825 = vadd.xlane.f32.xlu0 %v1824
        %v1826 = vpop.xlane.xlu0 %1825
        %v1827 = vrcp.pop %v1817
        %v1828 = vrcp.pop %v1820
        %v1829 = vrcp.pop %v1823
        %v1830 = vrcp.pop %v1826
        %v1831 = vmul.f32 %v1808, %v1827
        %v1832 = vmul.f32 %v1810, %v1828
        %v1833 = vmul.f32 %v1812, %v1829
        %v1834 = vmul.f32 %v1814, %v1830
        %v1835 = vpack.c.bf16 %v1831, %v1831
        %v1836 = vpack.c.bf16 %v1832, %v1832
        %v1837 = vpack.c.bf16 %v1833, %v1833
        %v1838 = vpack.c.bf16 %v1834, %v1834
        %v1840 = vsel %vm1790, %v1835, 0
        %v1843 = vsel %vm1790, %v1701, 0
        %1845 = vmatpush.bf16.xpose.msra.mxu0 0
        %1846 = vmatpush.bf16.xpose.msra.mxu0 0
        %1847 = vmatpush.bf16.xpose.msra.mxu0 0
        %1848 = vmatpush.bf16.xpose.msra.mxu0 0
        %1849 = vmatpush.bf16.xpose.msra.mxu0 0
        %1850 = vmatpush.bf16.xpose.msra.mxu0 0
        %1851 = vmatpush.bf16.xpose.msra.mxu0 0
        %1852 = vmatpush.bf16.xpose.msra.mxu0 %v1843
        %1853 = vmatmul.bf16.gmra.mxu0 %v1840
        %v1854 = vpop.f32.mrf.mxu0
        %v1855 = vadd.f32 0.0, %v1854
        %v1856 = vpop.f32.mrf.mxu0
        %1857 = vdwg.mxu0
        %v1859 = vsel %vm1790, %v1836, 0
        %v1862 = vsel %vm1790, %v1702, 0
        %1864 = vmatpush.bf16.xpose.msra.mxu0 0
        %1865 = vmatpush.bf16.xpose.msra.mxu0 0
        %1866 = vmatpush.bf16.xpose.msra.mxu0 0
        %1867 = vmatpush.bf16.xpose.msra.mxu0 0
        %1868 = vmatpush.bf16.xpose.msra.mxu0 0
        %1869 = vmatpush.bf16.xpose.msra.mxu0 0
        %1870 = vmatpush.bf16.xpose.msra.mxu0 0
        %1871 = vmatpush.bf16.xpose.msra.mxu0 %v1862
        %1872 = vmatmul.bf16.gmra.mxu0 %v1859
        %v1873 = vpop.f32.mrf.mxu0
        %v1874 = vadd.f32 0.0, %v1873
        %v1875 = vpop.f32.mrf.mxu0
        %1876 = vdwg.mxu0
        %v1878 = vsel %vm1790, %v1837, 0
        %v1881 = vsel %vm1790, %v1703, 0
        %1883 = vmatpush.bf16.xpose.msra.mxu0 0
        %1884 = vmatpush.bf16.xpose.msra.mxu0 0
        %1885 = vmatpush.bf16.xpose.msra.mxu0 0
        %1886 = vmatpush.bf16.xpose.msra.mxu0 0
        %1887 = vmatpush.bf16.xpose.msra.mxu0 0
        %1888 = vmatpush.bf16.xpose.msra.mxu0 0
        %1889 = vmatpush.bf16.xpose.msra.mxu0 0
        %1890 = vmatpush.bf16.xpose.msra.mxu0 %v1881
        %1891 = vmatmul.bf16.gmra.mxu0 %v1878
        %v1892 = vpop.f32.mrf.mxu0
        %v1893 = vadd.f32 0.0, %v1892
        %v1894 = vpop.f32.mrf.mxu0
        %1895 = vdwg.mxu0
        %v1897 = vsel %vm1790, %v1838, 0
        %v1900 = vsel %vm1790, %v1704, 0
        %1902 = vmatpush.bf16.xpose.msra.mxu0 0
        %1903 = vmatpush.bf16.xpose.msra.mxu0 0
        %1904 = vmatpush.bf16.xpose.msra.mxu0 0
        %1905 = vmatpush.bf16.xpose.msra.mxu0 0
        %1906 = vmatpush.bf16.xpose.msra.mxu0 0
        %1907 = vmatpush.bf16.xpose.msra.mxu0 0
        %1908 = vmatpush.bf16.xpose.msra.mxu0 0
        %1909 = vmatpush.bf16.xpose.msra.mxu0 %v1900
        %1910 = vmatmul.bf16.gmra.mxu0 %v1897
        %v1911 = vpop.f32.mrf.mxu0
        %v1912 = vadd.f32 0.0, %v1911
        %v1913 = vpop.f32.mrf.mxu0
        %1914 = vdwg.mxu0
        %v1915 = vpack.c.bf16 %v1855, %v1855
        %v1916 = vpack.c.bf16 %v1874, %v1874
        %v1917 = vpack.c.bf16 %v1893, %v1893
        %v1918 = vpack.c.bf16 %v1912, %v1912
        %v1920 = vsel %vm1082, %v1915, 0
        %v1923 = vsel %vm1086, %v1705, 0
        %1925 = vmatpush.bf16.msra.mxu0 0
        %1926 = vmatpush.bf16.msra.mxu0 0
        %1927 = vmatpush.bf16.msra.mxu0 0
        %1928 = vmatpush.bf16.msra.mxu0 0
        %1929 = vmatpush.bf16.msra.mxu0 0
        %1930 = vmatpush.bf16.msra.mxu0 0
        %1931 = vmatpush.bf16.msra.mxu0 0
        %1932 = vmatpush.bf16.msra.mxu0 %v1923
        %1933 = vmatmul.bf16.gmra.mxu0 %v1920
        %v1934 = vpop.f32.mrf.mxu0
        %v1935 = vadd.f32 0.0, %v1934
        %v1936 = vpop.f32.mrf.mxu0
        %1937 = vdwg.mxu0
        %v1939 = vsel %vm1082, %v1916, 0
        %v1942 = vsel %vm1086, %v1706, 0
        %1944 = vmatpush.bf16.msra.mxu0 0
        %1945 = vmatpush.bf16.msra.mxu0 0
        %1946 = vmatpush.bf16.msra.mxu0 0
        %1947 = vmatpush.bf16.msra.mxu0 0
        %1948 = vmatpush.bf16.msra.mxu0 0
        %1949 = vmatpush.bf16.msra.mxu0 0
        %1950 = vmatpush.bf16.msra.mxu0 0
        %1951 = vmatpush.bf16.msra.mxu0 %v1942
        %1952 = vmatmul.bf16.gmra.mxu0 %v1939
        %v1953 = vpop.f32.mrf.mxu0
        %v1954 = vadd.f32 0.0, %v1953
        %v1955 = vpop.f32.mrf.mxu0
        %1956 = vdwg.mxu0
        %v1958 = vsel %vm1082, %v1917, 0
        %v1961 = vsel %vm1086, %v1707, 0
        %1963 = vmatpush.bf16.msra.mxu0 0
        %1964 = vmatpush.bf16.msra.mxu0 0
        %1965 = vmatpush.bf16.msra.mxu0 0
        %1966 = vmatpush.bf16.msra.mxu0 0
        %1967 = vmatpush.bf16.msra.mxu0 0
        %1968 = vmatpush.bf16.msra.mxu0 0
        %1969 = vmatpush.bf16.msra.mxu0 0
        %1970 = vmatpush.bf16.msra.mxu0 %v1961
        %1971 = vmatmul.bf16.gmra.mxu0 %v1958
        %v1972 = vpop.f32.mrf.mxu0
        %v1973 = vadd.f32 0.0, %v1972
        %v1974 = vpop.f32.mrf.mxu0
        %1975 = vdwg.mxu0
        %v1977 = vsel %vm1082, %v1918, 0
        %v1980 = vsel %vm1086, %v1708, 0
        %1982 = vmatpush.bf16.msra.mxu0 0
        %1983 = vmatpush.bf16.msra.mxu0 0
        %1984 = vmatpush.bf16.msra.mxu0 0
        %1985 = vmatpush.bf16.msra.mxu0 0
        %1986 = vmatpush.bf16.msra.mxu0 0
        %1987 = vmatpush.bf16.msra.mxu0 0
        %1988 = vmatpush.bf16.msra.mxu0 0
        %1989 = vmatpush.bf16.msra.mxu0 %v1980
        %1990 = vmatmul.bf16.gmra.mxu0 %v1977
        %v1991 = vpop.f32.mrf.mxu0
        %v1992 = vadd.f32 0.0, %v1991
        %v1993 = vpop.f32.mrf.mxu0
        %1994 = vdwg.mxu0
        %v1995 = vsel %vm888, %v1935, 0.0
        %v1996 = vsel %vm888, %v1954, 0.0
        %v1997 = vadd.f32 %v1995, %v1996
        %v1998 = vsel %vm888, %v1973, 0.0
        %v1999 = vadd.f32 %v1997, %v1998
        %v2000 = vsel %vm888, %v1992, 0.0
        %v2001 = vadd.f32 %v1999, %v2000
        %v2003 = vperm.slane %v1709, 0
        %v2005 = vadd.f32 %v2001, %v2003
        %v2006 = vadd.f32 %v1425, %v2005
        %v2007 = vld [vmem:[%s19] sm:$0x1]
        %v2008 = vld [vmem:[%s20] sm:$0x1]
        %v2009 = vsel %vm888, %v2006, 0.0
        %2010 = vadd.xlane.f32.xlu0 %v2009
        %v2011 = vpop.xlane.xlu0 %2010
        %v2012 = vmul.f32 %v2011, %v1398
        %v2013 = vsub.f32 %v2006, %v2012
        %v2014 = vmul.f32 %v2013, %v2013
        %v2015 = vsel %vm888, %v2014, 0.0
        %2016 = vadd.xlane.f32.xlu0 %v2015
        %v2017 = vpop.xlane.xlu0 %2016
        %v2018 = vmul.f32 %v2017, %v1398
        %v2019 = vadd.f32 %v2018, 1e-05
        %v2020 = vrsqrt.pop %v2019
        %v2021 = vmul.f32 %v2020, %v2019
        %v2022 = vmul.f32 %v2021, %v2020
        %v2023 = vmul.f32 0.5, %v2022
        %v2024 = vsub.f32 1.5, %v2023
        %v2025 = vmul.f32 %v2020, %v2024
        %vm2026 = vweird.f32 %v2019
        %vm2027 = vweird.f32 %v2020
        %vm2028 = vmor %vm2026, %vm2027
        %v2029 = vsel %vm2028, %v2020, %v2025
        %v2030 = vmul.f32 %v2013, %v2029
        %v2032 = vperm.slane %v2007, 0
        %v2034 = vmul.f32 %v2030, %v2032
        %v2036 = vperm.slane %v2008, 0
        %v2038 = vadd.f32 %v2034, %v2036
        %v2039 = vpack.c.bf16 %v2038, %v2038
        %v2040 = vld [vmem:[#allocation13] sm:$0xf]
        %v2041 = vld [vmem:[#allocation13 + $0x4] sm:$0xf]
        %v2042 = vld [vmem:[#allocation13 + $0x8] sm:$0xf]
        %v2043 = vld [vmem:[#allocation13 + $0xc] sm:$0xf]
        %v2044 = vld [vmem:[%s14] sm:$0x1]
        %v2046 = vperm.slane %v2044, 0
        %v2052 = vunpack.c.l.b16 %v2040
        %v2053 = vunpack.c.l.b16 %v2041
        %v2054 = vunpack.c.l.b16 %v2042
        %v2055 = vunpack.c.l.b16 %v2043
        %v2056 = vpack.c.b16 %v2053, %v2052
        %v2057 = vpack.c.b16 %v2055, %v2054
        %v2061 = vsel %vm888, %v2039, 0
        %2063 = vmatpush.bf16.msra.mxu0 0
        %2064 = vmatpush.bf16.msra.mxu0 0
        %2065 = vmatpush.bf16.msra.mxu0 0
        %2066 = vmatpush.bf16.msra.mxu0 0
        %2067 = vmatpush.bf16.msra.mxu0 0
        %2068 = vmatpush.bf16.msra.mxu0 0
        %2069 = vmatpush.bf16.msra.mxu0 %v2057
        %2070 = vmatpush.bf16.msra.mxu0 %v2056
        %2071 = vmatmul.bf16.gmra.mxu0 %v2061
        %v2072 = vpop.f32.mrf.mxu0
        %v2073 = vadd.f32 %v2046, %v2072
        %v2074 = vpop.f32.mrf.mxu0
        %2075 = vdwg.mxu0
        %v2076 = vmax.f32 %v2073, 0.0
        %v2077 = vpack.c.bf16 %v2076, %v2076
        %v2078 = vld [vmem:[%s15] sm:$0xf]
        %v2079 = vld [vmem:[%s15 + $0x4] sm:$0xf]
        %v2080 = vld [vmem:[%s15 + $0x8] sm:$0xf]
        %v2081 = vld [vmem:[%s15 + $0xc] sm:$0xf]
        %v2082 = vld [vmem:[%s15 + $0x10] sm:$0xf]
        %v2083 = vld [vmem:[%s15 + $0x14] sm:$0xf]
        %v2084 = vld [vmem:[%s15 + $0x18] sm:$0xf]
        %v2085 = vld [vmem:[%s15 + $0x1c] sm:$0xf]
        %v2086 = vld [vmem:[%s16] sm:$0x1]
        %v2088 = vperm.slane %v2086, 0
        %v2098 = vunpack.c.l.b16 %v2078
        %v2099 = vunpack.c.l.b16 %v2079
        %v2100 = vunpack.c.l.b16 %v2080
        %v2101 = vunpack.c.l.b16 %v2081
        %v2102 = vunpack.c.l.b16 %v2082
        %v2103 = vunpack.c.l.b16 %v2083
        %v2104 = vunpack.c.l.b16 %v2084
        %v2105 = vunpack.c.l.b16 %v2085
        %v2106 = vpack.c.b16 %v2099, %v2098
        %v2107 = vpack.c.b16 %v2101, %v2100
        %v2108 = vpack.c.b16 %v2103, %v2102
        %v2109 = vpack.c.b16 %v2105, %v2104
        %vm2114 = vcmask 523264
        %v2116 = vsel %vm2114, %v2077, 0
        %2118 = vmatpush.bf16.msra.mxu0 0
        %2119 = vmatpush.bf16.msra.mxu0 0
        %2120 = vmatpush.bf16.msra.mxu0 0
        %2121 = vmatpush.bf16.msra.mxu0 0
        %2122 = vmatpush.bf16.msra.mxu0 %v2109
        %2123 = vmatpush.bf16.msra.mxu0 %v2108
        %2124 = vmatpush.bf16.msra.mxu0 %v2107
        %2125 = vmatpush.bf16.msra.mxu0 %v2106
        %2126 = vmatmul.bf16.gmra.mxu0 %v2116
        %v2127 = vpop.f32.mrf.mxu0
        %v2128 = vadd.f32 %v2088, %v2127
        %v2129 = vpop.f32.mrf.mxu0
        %2130 = vdwg.mxu0
        %v2131 = vadd.f32 %v2038, %v2128
        %v2132 = vld [vmem:[%s21] sm:$0x1]
        %v2133 = vld [vmem:[%s22] sm:$0x1]
        %v2134 = vsel %vm888, %v2131, 0.0
        %2135 = vadd.xlane.f32.xlu0 %v2134
        %v2136 = vpop.xlane.xlu0 %2135
        %v2137 = vmul.f32 %v2136, %v1398
        %v2138 = vsub.f32 %v2131, %v2137
        %v2139 = vmul.f32 %v2138, %v2138
        %v2140 = vsel %vm888, %v2139, 0.0
        %2141 = vadd.xlane.f32.xlu0 %v2140
        %v2142 = vpop.xlane.xlu0 %2141
        %v2143 = vmul.f32 %v2142, %v1398
        %v2144 = vadd.f32 %v2143, 1e-05
        %v2145 = vrsqrt.pop %v2144
        %v2146 = vmul.f32 %v2145, %v2144
        %v2147 = vmul.f32 %v2146, %v2145
        %v2148 = vmul.f32 0.5, %v2147
        %v2149 = vsub.f32 1.5, %v2148
        %v2150 = vmul.f32 %v2145, %v2149
        %vm2151 = vweird.f32 %v2144
        %vm2152 = vweird.f32 %v2145
        %vm2153 = vmor %vm2151, %vm2152
        %v2154 = vsel %vm2153, %v2145, %v2150
        %v2155 = vmul.f32 %v2138, %v2154
        %v2157 = vperm.slane %v2132, 0
        %v2159 = vmul.f32 %v2155, %v2157
        %v2161 = vperm.slane %v2133, 0
        %v2163 = vadd.f32 %v2159, %v2161
        %2164 = vst.msk [vmem:[%s851] sm:$0xff] %vm888, %v2163
        %s2165 = sand.u32 %s549, 1
        %s2166 = scalar_lea.sflag [#allocation4], %s2165
        %s2167 = sand.u32 %s549, 1
        %s2168 = smul.addr %s2167, 8
        %s2169 = scalar_lea.vmem [#allocation14], %s2168
        // Predicated region
        $region141: #{tpu_custom_call.1} parent=111 // pred_check
          %p2170 = pneg %p559
        $region142: #{tpu_custom_call.1} parent=111 // pred_check_branch
          %2172 = sbr.rel (%p2170) target = $region144
        $region143: #{tpu_custom_call.1} parent=111 // pred_region
          %2174 = vsyncadd %s2166, 0
          %s2175 = smul.addr %s43, 8
          %s2176 = scalar_lea.hbm %s23, %s2175
          %s2178 = sshll.u32 %s2169, 4
          %s2179 = int_to_ptr.vmem [resolvable:$true] %s2178
          %s2180 = sshll.u32 %s2176, 4
          %s2181 = int_to_ptr.hbm [resolvable:$true] %s2180
          %2183 = dma.vmem_to_hbm [thread:$0]  %s2179, 128, %s2181, %s2166
        $region144: #{tpu_custom_call.1} parent=111 // pred_fallthru
          _
      $region112: #{tpu_custom_call.1} parent=5 // pred_fallthru
        _
      %p2184 = scmp.le.s32.totalorder 2, %s38
      // Predicated region
      $region145: #{tpu_custom_call.1} parent=5 // pred_check
        %p2185 = pneg %p2184
      $region146: #{tpu_custom_call.1} parent=5 // pred_check_branch
        %2187 = sbr.rel (%p2185) target = $region148
      $region147: #{tpu_custom_call.1} parent=5 // pred_region
        %s2188 = ssub.s32 %s38, 2
        // Predicated region
        $region149: #{tpu_custom_call.1} parent=147 // pred_check
          %p2189 = pneg %p565
        $region150: #{tpu_custom_call.1} parent=147 // pred_check_branch
          %2191 = sbr.rel (%p2189) target = $region152
        $region151: #{tpu_custom_call.1} parent=147 // pred_region
          %s2192 = sand.u32 %s550, 1
          %s2193 = scalar_lea.sflag [#allocation4], %s2192
          %s2194 = sand.u32 %s550, 1
          %s2195 = smul.addr %s2194, 8
          %s2196 = scalar_lea.vmem [#allocation14], %s2195
          %2198 = dma.done %s2193, 128
        $region152: #{tpu_custom_call.1} parent=147 // pred_fallthru
          _
      $region148: #{tpu_custom_call.1} parent=5 // pred_fallthru
        _
    $region6: #{tpu_custom_call.1} parent=1 // loop_footer
      %s42 = sadd.s32 1, %s38
    $region7: #{tpu_custom_call.1} parent=1 // loop_footer_branch
      %37 = sbr.rel target = $region3
    $region8: #{tpu_custom_call.1} parent=1 // loop_exit
      _
    %2199 = vsyncpa [#allocation3], 1
    %s2200 = scalar_lea.sflag [#allocation3], 1
    %2201 = vsyncpa %s2200, 1
    %2202 = vsyncpa [#allocation6], 1
    %2203 = vsyncpa [#allocation9], 1
    %2204 = vsyncpa [#allocation12], 1
    %2205 = vsyncpa [#allocation4], 1
    %s2206 = scalar_lea.sflag [#allocation4], 1
    %2207 = vsyncpa %s2206, 1

</llo_original>
